<compile_context>
chip_gen: v7x
topology: tpu7x:2x2x1
jax: 0.10.0
libtpu: 0.0.40
codegen_flags: <defaults>
</compile_context>

<pallas_src>
import jax
import jax.numpy as jnp
from jax.experimental import pallas as pl
from jax.experimental.pallas import tpu as pltpu

LATENT_DIM = 100    # module latent_dim
K_PAD = 128         # latent dim padded to a full lane group
HIDDEN1 = 256
HIDDEN2 = 512
OUT_DIM = 653       # module input_dim (generator output width)
OUT_PAD = 768       # 653 padded up to a multiple of 128

_GRANULE = 16       # bf16 sublane packing: keep batch tiles multiples of 16
_TB_MAX = 1024      # largest batch tile (sweep-preferred; ~10 MiB VMEM footprint)


def _round_up(x, m):
    return ((x + m - 1) // m) * m


def _cdiv(a, b):
    return (a + b - 1) // b


def _pick_batch_tile(B, tb_max=_TB_MAX):
    """Adaptive batch tile: minimal padding waste, >=2 grid steps when the
    batch is big enough so v7x can shard the 'parallel' axis over both TCs."""
    b_g = _round_up(B, _GRANULE)
    if b_g <= 256:
        return b_g                                   # one small tile, <16 rows padding
    n_steps = max(2, _cdiv(b_g, tb_max))             # >=2 steps for the megacore split
    return _round_up(_cdiv(b_g, n_steps), _GRANULE)


def generator_kernel(z_ref, w1_ref, b1_ref, w2_ref, b2_ref, w3_ref, b3_ref, out_ref):
    # z_ref: (TB, 128) bf16; weights bf16; biases f32; accumulation f32 on MXU.
    h1 = jnp.dot(z_ref[...], w1_ref[...], preferred_element_type=jnp.float32)
    h1 = jnp.maximum(h1 + b1_ref[...], 0.0)
    h2 = jnp.dot(h1.astype(jnp.bfloat16), w2_ref[...],
                 preferred_element_type=jnp.float32)
    h2 = jnp.maximum(h2 + b2_ref[...], 0.0)
    out = jnp.dot(h2.astype(jnp.bfloat16), w3_ref[...],
                  preferred_element_type=jnp.float32)
    out_ref[...] = (out + b3_ref[...]).astype(out_ref.dtype)


def generator_forward(z, params, *, tb=None, out_dtype=jnp.float32, crop=True):
    """z: (B, 100) float.  params: padded bf16 weights / f32 biases from init_params.

    crop=True  -> returns (B, 653) in `out_dtype` (module semantics; extra XLA copy).
    crop=False -> returns the padded (b_pad, 768) slab straight from the kernel;
                  consumers must ignore rows >= B and lanes >= 653.
    """
    w1, b1, w2, b2, w3, b3 = params
    B = z.shape[0]

    # bf16 z before padding: halves the z HBM stream and the pad copy.
    z_p = jnp.pad(z.astype(jnp.bfloat16), ((0, 0), (0, K_PAD - z.shape[1])))

    if tb is None:
        tb = _pick_batch_tile(B)
    else:
        tb = max(_GRANULE, min(_round_up(tb, _GRANULE), _round_up(B, _GRANULE)))
    b_pad = _round_up(B, tb)
    if b_pad != B:
        z_p = jnp.pad(z_p, ((0, b_pad - B), (0, 0)))
    grid = (b_pad // tb,)

    out_itemsize = jnp.dtype(out_dtype).itemsize
    weight_bytes = sum(int(x.size) * x.dtype.itemsize for x in (w1, b1, w2, b2, w3, b3))
    cost = pl.CostEstimate(
        flops=2 * b_pad * (K_PAD * HIDDEN1 + HIDDEN1 * HIDDEN2 + HIDDEN2 * OUT_PAD),
        transcendentals=0,
        bytes_accessed=int(z_p.size) * 2 + b_pad * OUT_PAD * out_itemsize + weight_bytes,
    )

    out = pl.pallas_call(
        generator_kernel,
        out_shape=jax.ShapeDtypeStruct((b_pad, OUT_PAD), out_dtype),
        grid_spec=pltpu.PrefetchScalarGridSpec(
            num_scalar_prefetch=0,
            grid=grid,
            in_specs=[
                pl.BlockSpec((tb, K_PAD), lambda i: (i, 0)),          # z block (pipelined)
                pl.BlockSpec((K_PAD, HIDDEN1), lambda i: (0, 0)),     # weights: VMEM-resident
                pl.BlockSpec((1, HIDDEN1), lambda i: (0, 0)),
                pl.BlockSpec((HIDDEN1, HIDDEN2), lambda i: (0, 0)),
                pl.BlockSpec((1, HIDDEN2), lambda i: (0, 0)),
                pl.BlockSpec((HIDDEN2, OUT_PAD), lambda i: (0, 0)),
                pl.BlockSpec((1, OUT_PAD), lambda i: (0, 0)),
            ],
            out_specs=pl.BlockSpec((tb, OUT_PAD), lambda i: (i, 0)),
        ),
        compiler_params=pltpu.CompilerParams(
            dimension_semantics=("parallel",),      # batch axis -> both v7x TCs
            vmem_limit_bytes=48 * 1024 * 1024,      # headroom for tb up to 1024 on v5e
        ),
        cost_estimate=cost,
    )(z_p, w1, b1, w2, b2, w3, b3)

    if crop:
        # NOTE: this lane-slice is a separate HBM copy of the whole output; perf
        # critical callers should use crop=False and mask downstream instead.
        return out[:B, :OUT_DIM]
    return out


def init_params(key):
    """PyTorch-default Linear init (U(-1/sqrt(fan_in), +1/sqrt(fan_in))), then
    zero-padded to tile-friendly shapes and weights cast to bf16."""
    def linear_init(k, fan_in, fan_out):
        kw, kb = jax.random.split(k)
        bound = 1.0 / jnp.sqrt(jnp.float32(fan_in))
        w = jax.random.uniform(kw, (fan_in, fan_out), jnp.float32, -bound, bound)
        b = jax.random.uniform(kb, (1, fan_out), jnp.float32, -bound, bound)
        return w, b

    k1, k2, k3 = jax.random.split(key, 3)
    w1, b1 = linear_init(k1, LATENT_DIM, HIDDEN1)
    w2, b2 = linear_init(k2, HIDDEN1, HIDDEN2)
    w3, b3 = linear_init(k3, HIDDEN2, OUT_DIM)

    # Pad ragged dims with zeros (semantically neutral), cast weights to bf16.
    w1 = jnp.pad(w1, ((0, K_PAD - LATENT_DIM), (0, 0))).astype(jnp.bfloat16)
    w3 = jnp.pad(w3, ((0, 0), (0, OUT_PAD - OUT_DIM))).astype(jnp.bfloat16)
    b3 = jnp.pad(b3, ((0, 0), (0, OUT_PAD - OUT_DIM)))
    w2 = w2.astype(jnp.bfloat16)
    return (w1, b1, w2, b2, w3, b3)


def reference_forward(z, params):
    """Pure-JAX reference: same bf16-quantized weights and bf16-quantized z as
    the kernel input, f32 activations throughout."""
    w1, b1, w2, b2, w3, b3 = params
    z = z.astype(jnp.bfloat16).astype(jnp.float32)
    z_p = jnp.pad(z, ((0, 0), (0, K_PAD - z.shape[1])))
    h1 = jnp.maximum(z_p @ w1.astype(jnp.float32) + b1, 0.0)
    h2 = jnp.maximum(h1 @ w2.astype(jnp.float32) + b2, 0.0)
    out = h2 @ w3.astype(jnp.float32) + b3
    return out[:, :OUT_DIM]


if __name__ == "__main__":
    key = jax.random.PRNGKey(0)
    kp, kz1, kz2 = jax.random.split(key, 3)
    params = init_params(kp)

    # Small-batch check (launch/DMA-bound regime).
    B = 8
    z = jax.random.normal(kz1, (B, LATENT_DIM), jnp.float32)
    out = jax.block_until_ready(generator_forward(z, params))
    ref = reference_forward(z, params)
    assert out.shape == (B, OUT_DIM)
    assert jnp.allclose(out, ref, atol=1e-2, rtol=1e-2), float(jnp.max(jnp.abs(out - ref)))

    # Adaptive-tile multi-step check: B=300 -> two 160-row tiles (20 rows of
    # padding instead of the previous 212), exercising the pipelined batch axis.
    B2 = 300
    z2 = jax.random.normal(kz2, (B2, LATENT_DIM), jnp.float32)
    out2 = jax.block_until_ready(generator_forward(z2, params))
    ref2 = reference_forward(z2, params)
    assert out2.shape == (B2, OUT_DIM)
    assert jnp.allclose(out2, ref2, atol=1e-2, rtol=1e-2), float(jnp.max(jnp.abs(out2 - ref2)))

    # Fast path: bf16 output, no post-kernel crop (consumers ignore padded rows/lanes).
    out3 = jax.block_until_ready(
        generator_forward(z2, params, out_dtype=jnp.bfloat16, crop=False))
    assert out3.shape[1] == OUT_PAD and out3.dtype == jnp.bfloat16
    assert jnp.allclose(out3[:B2, :OUT_DIM].astype(jnp.float32), ref2, atol=5e-2, rtol=5e-2)

    print("KERNEL_OK")
</pallas_src>

<mosaic_0001>
module attributes {stable_mosaic.version = 11 : i64} {
  func.func @generator_kernel(%arg0: i32, %arg1: memref<16x128xbf16, #tpu.memory_space<vmem>>, %arg2: memref<128x256xbf16, #tpu.memory_space<vmem>>, %arg3: memref<1x256xf32, #tpu.memory_space<vmem>>, %arg4: memref<256x512xbf16, #tpu.memory_space<vmem>>, %arg5: memref<1x512xf32, #tpu.memory_space<vmem>>, %arg6: memref<512x768xbf16, #tpu.memory_space<vmem>>, %arg7: memref<1x768xf32, #tpu.memory_space<vmem>>, %arg8: memref<16x768xf32, #tpu.memory_space<vmem>>) attributes {dimension_semantics = [#tpu.dimension_semantics<parallel>], iteration_bounds = array<i64: 1>, scalar_prefetch = 0 : i64, scratch_operands = 0 : i64, tpu.core_type = #tpu.core_type<tc>, window_params = [{transform_indices = @transform_0, window_bounds = array<i64: 16, 128>}, {pipeline_mode = #tpu.pipeline_mode<synchronous>, transform_indices = @transform_1, window_bounds = array<i64: 128, 256>}, {pipeline_mode = #tpu.pipeline_mode<synchronous>, transform_indices = @transform_2, window_bounds = array<i64: 1, 256>}, {pipeline_mode = #tpu.pipeline_mode<synchronous>, transform_indices = @transform_3, window_bounds = array<i64: 256, 512>}, {pipeline_mode = #tpu.pipeline_mode<synchronous>, transform_indices = @transform_4, window_bounds = array<i64: 1, 512>}, {pipeline_mode = #tpu.pipeline_mode<synchronous>, transform_indices = @transform_5, window_bounds = array<i64: 512, 768>}, {pipeline_mode = #tpu.pipeline_mode<synchronous>, transform_indices = @transform_6, window_bounds = array<i64: 1, 768>}, {transform_indices = @transform_7, window_bounds = array<i64: 16, 768>}]} {
    %c0 = arith.constant 0 : index
    %c0_0 = arith.constant 0 : index
    %0 = vector.load %arg1[%c0, %c0_0] : memref<16x128xbf16, #tpu.memory_space<vmem>>, vector<16x128xbf16>
    %c0_1 = arith.constant 0 : index
    %c0_2 = arith.constant 0 : index
    %1 = vector.load %arg2[%c0_1, %c0_2] : memref<128x256xbf16, #tpu.memory_space<vmem>>, vector<128x256xbf16>
    %cst = arith.constant dense<0.000000e+00> : vector<16x256xf32>
    %2 = tpu.matmul %0, %1, %cst {dimension_numbers = #tpu.dot_dimension_numbers<[1], [0], [0], [1], [0, 0, 1, 1], [], []>} : vector<16x128xbf16>, vector<128x256xbf16>, vector<16x256xf32> -> vector<16x256xf32>
    %c0_3 = arith.constant 0 : index
    %c0_4 = arith.constant 0 : index
    %3 = vector.load %arg3[%c0_3, %c0_4] : memref<1x256xf32, #tpu.memory_space<vmem>>, vector<1x256xf32>
    %4 = vector.broadcast %3 : vector<1x256xf32> to vector<16x256xf32>
    %5 = arith.addf %2, %4 : vector<16x256xf32>
    %cst_5 = arith.constant 0.000000e+00 : f32
    %6 = vector.broadcast %cst_5 : f32 to vector<16x256xf32>
    %7 = arith.maximumf %5, %6 : vector<16x256xf32>
    %8 = arith.truncf %7 : vector<16x256xf32> to vector<16x256xbf16>
    %c0_6 = arith.constant 0 : index
    %c0_7 = arith.constant 0 : index
    %9 = vector.load %arg4[%c0_6, %c0_7] : memref<256x512xbf16, #tpu.memory_space<vmem>>, vector<256x512xbf16>
    %cst_8 = arith.constant dense<0.000000e+00> : vector<16x512xf32>
    %10 = tpu.matmul %8, %9, %cst_8 {dimension_numbers = #tpu.dot_dimension_numbers<[1], [0], [0], [1], [0, 0, 1, 1], [], []>} : vector<16x256xbf16>, vector<256x512xbf16>, vector<16x512xf32> -> vector<16x512xf32>
    %c0_9 = arith.constant 0 : index
    %c0_10 = arith.constant 0 : index
    %11 = vector.load %arg5[%c0_9, %c0_10] : memref<1x512xf32, #tpu.memory_space<vmem>>, vector<1x512xf32>
    %12 = vector.broadcast %11 : vector<1x512xf32> to vector<16x512xf32>
    %13 = arith.addf %10, %12 : vector<16x512xf32>
    %cst_11 = arith.constant 0.000000e+00 : f32
    %14 = vector.broadcast %cst_11 : f32 to vector<16x512xf32>
    %15 = arith.maximumf %13, %14 : vector<16x512xf32>
    %16 = arith.truncf %15 : vector<16x512xf32> to vector<16x512xbf16>
    %c0_12 = arith.constant 0 : index
    %c0_13 = arith.constant 0 : index
    %17 = vector.load %arg6[%c0_12, %c0_13] : memref<512x768xbf16, #tpu.memory_space<vmem>>, vector<512x768xbf16>
    %cst_14 = arith.constant dense<0.000000e+00> : vector<16x768xf32>
    %18 = tpu.matmul %16, %17, %cst_14 {dimension_numbers = #tpu.dot_dimension_numbers<[1], [0], [0], [1], [0, 0, 1, 1], [], []>} : vector<16x512xbf16>, vector<512x768xbf16>, vector<16x768xf32> -> vector<16x768xf32>
    %c0_15 = arith.constant 0 : index
    %c0_16 = arith.constant 0 : index
    %19 = vector.load %arg7[%c0_15, %c0_16] : memref<1x768xf32, #tpu.memory_space<vmem>>, vector<1x768xf32>
    %20 = vector.broadcast %19 : vector<1x768xf32> to vector<16x768xf32>
    %21 = arith.addf %18, %20 : vector<16x768xf32>
    %c0_17 = arith.constant 0 : index
    %c0_18 = arith.constant 0 : index
    %22 = vector.load %arg8[%c0_17, %c0_18] : memref<16x768xf32, #tpu.memory_space<vmem>>, vector<16x768xf32>
    tpu.vector_store %arg8[%c0_17, %c0_18], %21 {strides = array<i32>} : memref<16x768xf32, #tpu.memory_space<vmem>>, vector<16x768xf32>,
    return
  }
  func.func @transform_0(%arg0: i32) -> (i32, i32) {
    %c0_i32 = arith.constant 0 : i32
    %c0_i32_0 = arith.constant 0 : i32
    return %arg0, %c0_i32 : i32, i32
  }
  func.func @transform_1(%arg0: i32) -> (i32, i32) {
    %c0_i32 = arith.constant 0 : i32
    %c0_i32_0 = arith.constant 0 : i32
    %c0_i32_1 = arith.constant 0 : i32
    return %c0_i32, %c0_i32_0 : i32, i32
  }
  func.func @transform_2(%arg0: i32) -> (i32, i32) {
    %c0_i32 = arith.constant 0 : i32
    %c0_i32_0 = arith.constant 0 : i32
    %c0_i32_1 = arith.constant 0 : i32
    return %c0_i32, %c0_i32_0 : i32, i32
  }
  func.func @transform_3(%arg0: i32) -> (i32, i32) {
    %c0_i32 = arith.constant 0 : i32
    %c0_i32_0 = arith.constant 0 : i32
    %c0_i32_1 = arith.constant 0 : i32
    return %c0_i32, %c0_i32_0 : i32, i32
  }
  func.func @transform_4(%arg0: i32) -> (i32, i32) {
    %c0_i32 = arith.constant 0 : i32
    %c0_i32_0 = arith.constant 0 : i32
    %c0_i32_1 = arith.constant 0 : i32
    return %c0_i32, %c0_i32_0 : i32, i32
  }
  func.func @transform_5(%arg0: i32) -> (i32, i32) {
    %c0_i32 = arith.constant 0 : i32
    %c0_i32_0 = arith.constant 0 : i32
    %c0_i32_1 = arith.constant 0 : i32
    return %c0_i32, %c0_i32_0 : i32, i32
  }
  func.func @transform_6(%arg0: i32) -> (i32, i32) {
    %c0_i32 = arith.constant 0 : i32
    %c0_i32_0 = arith.constant 0 : i32
    %c0_i32_1 = arith.constant 0 : i32
    return %c0_i32, %c0_i32_0 : i32, i32
  }
  func.func @transform_7(%arg0: i32) -> (i32, i32) {
    %c0_i32 = arith.constant 0 : i32
    %c0_i32_0 = arith.constant 0 : i32
    return %arg0, %c0_i32 : i32, i32
  }
}

</mosaic_0001>

<llo_original>
// kernel: tpu_custom_call.1
$region0: #{tpu_custom_call.1}
  #allocation0 [shape = 'u32[]', space=smem, size = 0x4, offset = 0x4, fixed_abs, tag = 'smem constant byte address 0x4 - core index']
  #allocation1 [shape = 'u32[144,128]{1,0:T(1,128)}', space=vmem, size = 0x12000, scoped, tag = 'internal scratch']
  %s0 = inlined_call_operand.hbm [shape: bf16[16,128], index: 0, kind: input, shape index: {}]
  %s1 = inlined_call_operand.hbm [shape: bf16[128,256], index: 1, kind: input, shape index: {}]
  %s2 = inlined_call_operand.hbm [shape: f32[1,256], index: 2, kind: input, shape index: {}]
  %s3 = inlined_call_operand.hbm [shape: bf16[256,512], index: 3, kind: input, shape index: {}]
  %s4 = inlined_call_operand.vmem [shape: f32[1,512], index: 4, kind: input, shape index: {}]
  %s5 = inlined_call_operand.hbm [shape: bf16[512,768], index: 5, kind: input, shape index: {}]
  %s6 = inlined_call_operand.vmem [shape: f32[1,768], index: 6, kind: input, shape index: {}]
  %s7 = inlined_call_operand.hbm [shape: f32[16,768], index: 7, kind: output, shape index: {}]
  %s8 = sld [smem:[#allocation0]]
  $region58: #{tpu_custom_call.1} parent=0
    _
  %s10 = ssub.s32 1, %s8
  %s11 = scalar_select 0, %s10, %s8
  $region1: #{tpu_custom_call.1} parent=0
    #allocation2 [shape = 'u8[4096]{0}', space=vmem, size = 0x1000, scoped, tag = 'input window, operand 0, single buffered']
    #allocation3 [shape = 's32[1]{0}', space=sflag, size = 0x4, scoped, tag = 'scoped memory for tpu_custom_call.1']
    #allocation4 [shape = 's32[1]{0}', space=sflag, size = 0x4, scoped, tag = 'scoped memory for tpu_custom_call.1']
    #allocation5 [shape = 'u8[65536]{0}', space=vmem, size = 0x10000, scoped, tag = 'input window, operand 1, single buffered']
    #allocation6 [shape = 's32[1]{0}', space=sflag, size = 0x4, scoped, tag = 'scoped memory for tpu_custom_call.1']
    #allocation7 [shape = 'u8[1024]{0}', space=vmem, size = 0x400, scoped, tag = 'input window, operand 2, single buffered']
    #allocation8 [shape = 'u8[262144]{0}', space=vmem, size = 0x40000, scoped, tag = 'input window, operand 3, single buffered']
    #allocation9 [shape = 's32[1]{0}', space=sflag, size = 0x4, scoped, tag = 'scoped memory for tpu_custom_call.1']
    #allocation10 [shape = 'u8[786432]{0}', space=vmem, size = 0xc0000, scoped, tag = 'input window, operand 5, single buffered']
    #allocation11 [shape = 'u8[49152]{0}', space=vmem, size = 0xc000, scoped, tag = 'output window, operand 0, single buffered']
    %12 = vsyncpa [#allocation3], 0
    %13 = vsyncpa [#allocation6], 0
    %14 = vsyncpa [#allocation9], 0
    %15 = vsyncpa [#allocation4], 0
    // Predicated region
    $region2: #{tpu_custom_call.1} parent=1 // pred_check
      _
    $region3: #{tpu_custom_call.1} parent=1 // pred_check_branch
      %17 = sbr.rel (0) target = $region5
    $region4: #{tpu_custom_call.1} parent=1 // pred_region
      %s19 = ssub.s32 128, 128
      %20 = vsyncadd [#allocation3], %s19
      %s21 = sshll.u32 [#allocation2], 4
      %s22 = int_to_ptr.vmem [resolvable:$true] %s21
      %27 = dma.hbm_to_vmem [thread:$0]  %s0, 128, %s22, [#allocation3], 64, 64, 4
    $region5: #{tpu_custom_call.1} parent=1 // pred_fallthru
      _
    // Predicated region
    $region6: #{tpu_custom_call.1} parent=1 // pred_check
      _
    $region7: #{tpu_custom_call.1} parent=1 // pred_check_branch
      %29 = sbr.rel (0) target = $region9
    $region8: #{tpu_custom_call.1} parent=1 // pred_region
      %s31 = ssub.s32 2048, 2048
      %32 = vsyncadd [#allocation6], %s31
      %s33 = sshll.u32 [#allocation5], 4
      %s34 = int_to_ptr.vmem [resolvable:$true] %s33
      %39 = dma.hbm_to_vmem [thread:$0]  %s1, 2048, %s34, [#allocation6], 128, 128, 8
    $region9: #{tpu_custom_call.1} parent=1 // pred_fallthru
      _
    // Predicated region
    $region10: #{tpu_custom_call.1} parent=1 // pred_check
      _
    $region11: #{tpu_custom_call.1} parent=1 // pred_check_branch
      %41 = sbr.rel (0) target = $region13
    $region12: #{tpu_custom_call.1} parent=1 // pred_region
      %s43 = ssub.s32 32, 32
      %44 = vsyncadd [#allocation6], %s43
      %s46 = sshll.u32 [#allocation7], 4
      %s47 = int_to_ptr.vmem [resolvable:$true] %s46
      %49 = dma.hbm_to_vmem [thread:$0]  %s2, 32, %s47, [#allocation6]
    $region13: #{tpu_custom_call.1} parent=1 // pred_fallthru
      _
    // Predicated region
    $region14: #{tpu_custom_call.1} parent=1 // pred_check
      _
    $region15: #{tpu_custom_call.1} parent=1 // pred_check_branch
      %51 = sbr.rel (0) target = $region17
    $region16: #{tpu_custom_call.1} parent=1 // pred_region
      %s53 = ssub.s32 8192, 8192
      %54 = vsyncadd [#allocation9], %s53
      %s55 = sshll.u32 [#allocation8], 4
      %s56 = int_to_ptr.vmem [resolvable:$true] %s55
      %61 = dma.hbm_to_vmem [thread:$0]  %s3, 8192, %s56, [#allocation9], 256, 256, 16
    $region17: #{tpu_custom_call.1} parent=1 // pred_fallthru
      _
    // Predicated region
    $region18: #{tpu_custom_call.1} parent=1 // pred_check
      _
    $region19: #{tpu_custom_call.1} parent=1 // pred_check_branch
      %63 = sbr.rel (0) target = $region21
    $region20: #{tpu_custom_call.1} parent=1 // pred_region
      _
    $region21: #{tpu_custom_call.1} parent=1 // pred_fallthru
      _
    // Predicated region
    $region22: #{tpu_custom_call.1} parent=1 // pred_check
      _
    $region23: #{tpu_custom_call.1} parent=1 // pred_check_branch
      %65 = sbr.rel (0) target = $region25
    $region24: #{tpu_custom_call.1} parent=1 // pred_region
      %s67 = ssub.s32 24576, 24576
      %68 = vsyncadd [#allocation9], %s67
      %s69 = sshll.u32 [#allocation10], 4
      %s70 = int_to_ptr.vmem [resolvable:$true] %s69
      %75 = dma.hbm_to_vmem [thread:$0]  %s5, 24576, %s70, [#allocation9], 384, 384, 24
    $region25: #{tpu_custom_call.1} parent=1 // pred_fallthru
      _
    // Predicated region
    $region26: #{tpu_custom_call.1} parent=1 // pred_check
      _
    $region27: #{tpu_custom_call.1} parent=1 // pred_check_branch
      %77 = sbr.rel (0) target = $region29
    $region28: #{tpu_custom_call.1} parent=1 // pred_region
      _
    $region29: #{tpu_custom_call.1} parent=1 // pred_fallthru
      _
    // Predicated region
    $region30: #{tpu_custom_call.1} parent=1 // pred_check
      _
    $region31: #{tpu_custom_call.1} parent=1 // pred_check_branch
      %79 = sbr.rel (0) target = $region33
    $region32: #{tpu_custom_call.1} parent=1 // pred_region
      %80 = dma.done [#allocation3], 128
    $region33: #{tpu_custom_call.1} parent=1 // pred_fallthru
      _
    // Predicated region
    $region34: #{tpu_custom_call.1} parent=1 // pred_check
      _
    $region35: #{tpu_custom_call.1} parent=1 // pred_check_branch
      %82 = sbr.rel (0) target = $region37
    $region36: #{tpu_custom_call.1} parent=1 // pred_region
      %83 = dma.done [#allocation6], 2048
    $region37: #{tpu_custom_call.1} parent=1 // pred_fallthru
      _
    // Predicated region
    $region38: #{tpu_custom_call.1} parent=1 // pred_check
      _
    $region39: #{tpu_custom_call.1} parent=1 // pred_check_branch
      %85 = sbr.rel (0) target = $region41
    $region40: #{tpu_custom_call.1} parent=1 // pred_region
      %86 = dma.done [#allocation6], 32
    $region41: #{tpu_custom_call.1} parent=1 // pred_fallthru
      _
    // Predicated region
    $region42: #{tpu_custom_call.1} parent=1 // pred_check
      _
    $region43: #{tpu_custom_call.1} parent=1 // pred_check_branch
      %88 = sbr.rel (0) target = $region45
    $region44: #{tpu_custom_call.1} parent=1 // pred_region
      %89 = dma.done [#allocation9], 8192
    $region45: #{tpu_custom_call.1} parent=1 // pred_fallthru
      _
    // Predicated region
    $region46: #{tpu_custom_call.1} parent=1 // pred_check
      _
    $region47: #{tpu_custom_call.1} parent=1 // pred_check_branch
      %91 = sbr.rel (0) target = $region49
    $region48: #{tpu_custom_call.1} parent=1 // pred_region
      %92 = dma.done [#allocation9], 24576
    $region49: #{tpu_custom_call.1} parent=1 // pred_fallthru
      _
    %v94 = vld [vmem:[#allocation2] sm:$0xf]
    %v95 = vld [vmem:[#allocation2 + $0x4] sm:$0xf]
    %v96 = vld [vmem:[#allocation5] sm:$0xff]
    %v97 = vld [vmem:[#allocation5 + $0x8] sm:$0xff]
    %v98 = vld [vmem:[#allocation5 + $0x10] sm:$0xff]
    %v99 = vld [vmem:[#allocation5 + $0x18] sm:$0xff]
    %v100 = vld [vmem:[#allocation5 + $0x20] sm:$0xff]
    %v101 = vld [vmem:[#allocation5 + $0x28] sm:$0xff]
    %v102 = vld [vmem:[#allocation5 + $0x30] sm:$0xff]
    %v103 = vld [vmem:[#allocation5 + $0x38] sm:$0xff]
    %v104 = vld [vmem:[#allocation5 + $0x40] sm:$0xff]
    %v105 = vld [vmem:[#allocation5 + $0x48] sm:$0xff]
    %v106 = vld [vmem:[#allocation5 + $0x50] sm:$0xff]
    %v107 = vld [vmem:[#allocation5 + $0x58] sm:$0xff]
    %v108 = vld [vmem:[#allocation5 + $0x60] sm:$0xff]
    %v109 = vld [vmem:[#allocation5 + $0x68] sm:$0xff]
    %v110 = vld [vmem:[#allocation5 + $0x70] sm:$0xff]
    %v111 = vld [vmem:[#allocation5 + $0x78] sm:$0xff]
    %v112 = vld [vmem:[#allocation7] sm:$0x3]
    %v114 = vlaneseq
    %v115 = vshrl.u32 %v114, 7
    %v116 = vsub.s32 0, %v115
    %v117 = vrot.slane %v112, %v116
    %v118 = vlaneseq
    %v119 = vshrl.u32 %v118, 7
    %v120 = vsub.s32 1, %v119
    %v121 = vrot.slane %v112, %v120
    %v126 = vunpack.c.l.b16 %v94
    %v127 = vunpack.c.l.b16 %v95
    %v128 = vpack.c.b16 %v127, %v126
    %v146 = vunpack.c.l.b16 %v96
    %v147 = vunpack.c.h.b16 %v96
    %v148 = vunpack.c.l.b16 %v97
    %v149 = vunpack.c.h.b16 %v97
    %v150 = vunpack.c.l.b16 %v98
    %v151 = vunpack.c.h.b16 %v98
    %v152 = vunpack.c.l.b16 %v99
    %v153 = vunpack.c.h.b16 %v99
    %v154 = vunpack.c.l.b16 %v100
    %v155 = vunpack.c.h.b16 %v100
    %v156 = vunpack.c.l.b16 %v101
    %v157 = vunpack.c.h.b16 %v101
    %v158 = vunpack.c.l.b16 %v102
    %v159 = vunpack.c.h.b16 %v102
    %v160 = vunpack.c.l.b16 %v103
    %v161 = vunpack.c.h.b16 %v103
    %v162 = vunpack.c.l.b16 %v104
    %v163 = vunpack.c.h.b16 %v104
    %v164 = vunpack.c.l.b16 %v105
    %v165 = vunpack.c.h.b16 %v105
    %v166 = vunpack.c.l.b16 %v106
    %v167 = vunpack.c.h.b16 %v106
    %v168 = vunpack.c.l.b16 %v107
    %v169 = vunpack.c.h.b16 %v107
    %v170 = vunpack.c.l.b16 %v108
    %v171 = vunpack.c.h.b16 %v108
    %v172 = vunpack.c.l.b16 %v109
    %v173 = vunpack.c.h.b16 %v109
    %v174 = vunpack.c.l.b16 %v110
    %v175 = vunpack.c.h.b16 %v110
    %v176 = vunpack.c.l.b16 %v111
    %v177 = vunpack.c.h.b16 %v111
    %v178 = vpack.c.b16 %v148, %v146
    %v179 = vpack.c.b16 %v149, %v147
    %v180 = vpack.c.b16 %v152, %v150
    %v181 = vpack.c.b16 %v153, %v151
    %v182 = vpack.c.b16 %v156, %v154
    %v183 = vpack.c.b16 %v157, %v155
    %v184 = vpack.c.b16 %v160, %v158
    %v185 = vpack.c.b16 %v161, %v159
    %v186 = vpack.c.b16 %v164, %v162
    %v187 = vpack.c.b16 %v165, %v163
    %v188 = vpack.c.b16 %v168, %v166
    %v189 = vpack.c.b16 %v169, %v167
    %v190 = vpack.c.b16 %v172, %v170
    %v191 = vpack.c.b16 %v173, %v171
    %v192 = vpack.c.b16 %v176, %v174
    %v193 = vpack.c.b16 %v177, %v175
    %210 = vmatprep.subr.bf16.mxu0 %v179
    %211 = vmatpush1.bf16.msra.mxu0 %v178
    %212 = vmatprep.subr.bf16.mxu0 %v181
    %213 = vmatpush1.bf16.msra.mxu0 %v180
    %214 = vmatprep.subr.bf16.mxu0 %v183
    %215 = vmatpush1.bf16.msra.mxu0 %v182
    %216 = vmatprep.subr.bf16.mxu0 %v185
    %217 = vmatpush1.bf16.msra.mxu0 %v184
    %218 = vmatprep.subr.bf16.mxu0 %v187
    %219 = vmatpush1.bf16.msra.mxu0 %v186
    %220 = vmatprep.subr.bf16.mxu0 %v189
    %221 = vmatpush1.bf16.msra.mxu0 %v188
    %222 = vmatprep.subr.bf16.mxu0 %v191
    %223 = vmatpush1.bf16.msra.mxu0 %v190
    %224 = vmatprep.subr.bf16.mxu0 %v193
    %225 = vmatpush1.bf16.msra.mxu0 %v192
    %226 = vmatprep.subr.bf16.mxu0 0
    %227 = vmatpush1.bf16.msra.mxu0 0
    %228 = vmatprep.subr.bf16.mxu0 0
    %229 = vmatpush1.bf16.msra.mxu0 0
    %230 = vmatprep.subr.bf16.mxu0 0
    %231 = vmatpush1.bf16.msra.mxu0 0
    %232 = vmatprep.subr.bf16.mxu0 0
    %233 = vmatpush1.bf16.msra.mxu0 0
    %234 = vmatprep.subr.bf16.mxu0 0
    %235 = vmatpush1.bf16.msra.mxu0 0
    %236 = vmatprep.subr.bf16.mxu0 0
    %237 = vmatpush1.bf16.msra.mxu0 0
    %238 = vmatprep.subr.bf16.mxu0 0
    %239 = vmatpush1.bf16.msra.mxu0 0
    %240 = vmatprep.subr.bf16.mxu0 0
    %241 = vmatpush1.bf16.msra.mxu0 0
    %242 = vmatprep.mubr.bf16.mxu0 0
    %243 = vmatmul.mubr.bf16.gmra.mrb[0].mxu0 %v128
    %v244 = vpop.f32.mrb[0].mxu0
    %v245 = vadd.f32 %v117, %v244
    %v246 = vpop.f32.mrb[0].mxu0
    %v247 = vadd.f32 %v121, %v246
    %v248 = vpop.f32.mrb[0].mxu0
    %v249 = vadd.f32 %v117, %v248
    %v250 = vpop.f32.mrb[0].mxu0
    %v251 = vadd.f32 %v121, %v250
    %252 = vdwg.mxu0
    %v253 = vmax.f32 %v245, 0.0
    %v254 = vmax.f32 %v247, 0.0
    %v255 = vmax.f32 %v249, 0.0
    %v256 = vmax.f32 %v251, 0.0
    %v257 = vpack.c.bf16 %v255, %v253
    %v258 = vpack.c.bf16 %v256, %v254
    %v259 = vld [vmem:[#allocation8] sm:$0xff]
    %v260 = vld [vmem:[#allocation8 + $0x8] sm:$0xff]
    %v261 = vld [vmem:[#allocation8 + $0x10] sm:$0xff]
    %v262 = vld [vmem:[#allocation8 + $0x18] sm:$0xff]
    %v263 = vld [vmem:[#allocation8 + $0x20] sm:$0xff]
    %v264 = vld [vmem:[#allocation8 + $0x28] sm:$0xff]
    %v265 = vld [vmem:[#allocation8 + $0x30] sm:$0xff]
    %v266 = vld [vmem:[#allocation8 + $0x38] sm:$0xff]
    %v267 = vld [vmem:[#allocation8 + $0x40] sm:$0xff]
    %v268 = vld [vmem:[#allocation8 + $0x48] sm:$0xff]
    %v269 = vld [vmem:[#allocation8 + $0x50] sm:$0xff]
    %v270 = vld [vmem:[#allocation8 + $0x58] sm:$0xff]
    %v271 = vld [vmem:[#allocation8 + $0x60] sm:$0xff]
    %v272 = vld [vmem:[#allocation8 + $0x68] sm:$0xff]
    %v273 = vld [vmem:[#allocation8 + $0x70] sm:$0xff]
    %v274 = vld [vmem:[#allocation8 + $0x78] sm:$0xff]
    %v275 = vld [vmem:[#allocation8 + $0x80] sm:$0xff]
    %v276 = vld [vmem:[#allocation8 + $0x88] sm:$0xff]
    %v277 = vld [vmem:[#allocation8 + $0x90] sm:$0xff]
    %v278 = vld [vmem:[#allocation8 + $0x98] sm:$0xff]
    %v279 = vld [vmem:[#allocation8 + $0xa0] sm:$0xff]
    %v280 = vld [vmem:[#allocation8 + $0xa8] sm:$0xff]
    %v281 = vld [vmem:[#allocation8 + $0xb0] sm:$0xff]
    %v282 = vld [vmem:[#allocation8 + $0xb8] sm:$0xff]
    %v283 = vld [vmem:[#allocation8 + $0xc0] sm:$0xff]
    %v284 = vld [vmem:[#allocation8 + $0xc8] sm:$0xff]
    %v285 = vld [vmem:[#allocation8 + $0xd0] sm:$0xff]
    %v286 = vld [vmem:[#allocation8 + $0xd8] sm:$0xff]
    %v287 = vld [vmem:[#allocation8 + $0xe0] sm:$0xff]
    %v288 = vld [vmem:[#allocation8 + $0xe8] sm:$0xff]
    %v289 = vld [vmem:[#allocation8 + $0xf0] sm:$0xff]
    %v290 = vld [vmem:[#allocation8 + $0xf8] sm:$0xff]
    %v291 = vld [vmem:[#allocation8 + $0x100] sm:$0xff]
    %v292 = vld [vmem:[#allocation8 + $0x108] sm:$0xff]
    %v293 = vld [vmem:[#allocation8 + $0x110] sm:$0xff]
    %v294 = vld [vmem:[#allocation8 + $0x118] sm:$0xff]
    %v295 = vld [vmem:[#allocation8 + $0x120] sm:$0xff]
    %v296 = vld [vmem:[#allocation8 + $0x128] sm:$0xff]
    %v297 = vld [vmem:[#allocation8 + $0x130] sm:$0xff]
    %v298 = vld [vmem:[#allocation8 + $0x138] sm:$0xff]
    %v299 = vld [vmem:[#allocation8 + $0x140] sm:$0xff]
    %v300 = vld [vmem:[#allocation8 + $0x148] sm:$0xff]
    %v301 = vld [vmem:[#allocation8 + $0x150] sm:$0xff]
    %v302 = vld [vmem:[#allocation8 + $0x158] sm:$0xff]
    %v303 = vld [vmem:[#allocation8 + $0x160] sm:$0xff]
    %v304 = vld [vmem:[#allocation8 + $0x168] sm:$0xff]
    %v305 = vld [vmem:[#allocation8 + $0x170] sm:$0xff]
    %v306 = vld [vmem:[#allocation8 + $0x178] sm:$0xff]
    %v307 = vld [vmem:[#allocation8 + $0x180] sm:$0xff]
    %v308 = vld [vmem:[#allocation8 + $0x188] sm:$0xff]
    %v309 = vld [vmem:[#allocation8 + $0x190] sm:$0xff]
    %v310 = vld [vmem:[#allocation8 + $0x198] sm:$0xff]
    %v311 = vld [vmem:[#allocation8 + $0x1a0] sm:$0xff]
    %v312 = vld [vmem:[#allocation8 + $0x1a8] sm:$0xff]
    %v313 = vld [vmem:[#allocation8 + $0x1b0] sm:$0xff]
    %v314 = vld [vmem:[#allocation8 + $0x1b8] sm:$0xff]
    %v315 = vld [vmem:[#allocation8 + $0x1c0] sm:$0xff]
    %v316 = vld [vmem:[#allocation8 + $0x1c8] sm:$0xff]
    %v317 = vld [vmem:[#allocation8 + $0x1d0] sm:$0xff]
    %v318 = vld [vmem:[#allocation8 + $0x1d8] sm:$0xff]
    %v319 = vld [vmem:[#allocation8 + $0x1e0] sm:$0xff]
    %v320 = vld [vmem:[#allocation8 + $0x1e8] sm:$0xff]
    %v321 = vld [vmem:[#allocation8 + $0x1f0] sm:$0xff]
    %v322 = vld [vmem:[#allocation8 + $0x1f8] sm:$0xff]
    %v323 = vld [vmem:[%s4] sm:$0xf]
    %v325 = vlaneseq
    %v326 = vshrl.u32 %v325, 7
    %v327 = vsub.s32 0, %v326
    %v328 = vrot.slane %v323, %v327
    %v329 = vlaneseq
    %v330 = vshrl.u32 %v329, 7
    %v331 = vsub.s32 1, %v330
    %v332 = vrot.slane %v323, %v331
    %v333 = vlaneseq
    %v334 = vshrl.u32 %v333, 7
    %v335 = vsub.s32 2, %v334
    %v336 = vrot.slane %v323, %v335
    %v337 = vlaneseq
    %v338 = vshrl.u32 %v337, 7
    %v339 = vsub.s32 3, %v338
    %v340 = vrot.slane %v323, %v339
    %v409 = vunpack.c.l.b16 %v259
    %v410 = vunpack.c.h.b16 %v259
    %v411 = vunpack.c.l.b16 %v260
    %v412 = vunpack.c.h.b16 %v260
    %v413 = vunpack.c.l.b16 %v261
    %v414 = vunpack.c.h.b16 %v261
    %v415 = vunpack.c.l.b16 %v262
    %v416 = vunpack.c.h.b16 %v262
    %v417 = vunpack.c.l.b16 %v263
    %v418 = vunpack.c.h.b16 %v263
    %v419 = vunpack.c.l.b16 %v264
    %v420 = vunpack.c.h.b16 %v264
    %v421 = vunpack.c.l.b16 %v265
    %v422 = vunpack.c.h.b16 %v265
    %v423 = vunpack.c.l.b16 %v266
    %v424 = vunpack.c.h.b16 %v266
    %v425 = vunpack.c.l.b16 %v267
    %v426 = vunpack.c.h.b16 %v267
    %v427 = vunpack.c.l.b16 %v268
    %v428 = vunpack.c.h.b16 %v268
    %v429 = vunpack.c.l.b16 %v269
    %v430 = vunpack.c.h.b16 %v269
    %v431 = vunpack.c.l.b16 %v270
    %v432 = vunpack.c.h.b16 %v270
    %v433 = vunpack.c.l.b16 %v271
    %v434 = vunpack.c.h.b16 %v271
    %v435 = vunpack.c.l.b16 %v272
    %v436 = vunpack.c.h.b16 %v272
    %v437 = vunpack.c.l.b16 %v273
    %v438 = vunpack.c.h.b16 %v273
    %v439 = vunpack.c.l.b16 %v274
    %v440 = vunpack.c.h.b16 %v274
    %v441 = vunpack.c.l.b16 %v275
    %v442 = vunpack.c.h.b16 %v275
    %v443 = vunpack.c.l.b16 %v276
    %v444 = vunpack.c.h.b16 %v276
    %v445 = vunpack.c.l.b16 %v277
    %v446 = vunpack.c.h.b16 %v277
    %v447 = vunpack.c.l.b16 %v278
    %v448 = vunpack.c.h.b16 %v278
    %v449 = vunpack.c.l.b16 %v279
    %v450 = vunpack.c.h.b16 %v279
    %v451 = vunpack.c.l.b16 %v280
    %v452 = vunpack.c.h.b16 %v280
    %v453 = vunpack.c.l.b16 %v281
    %v454 = vunpack.c.h.b16 %v281
    %v455 = vunpack.c.l.b16 %v282
    %v456 = vunpack.c.h.b16 %v282
    %v457 = vunpack.c.l.b16 %v283
    %v458 = vunpack.c.h.b16 %v283
    %v459 = vunpack.c.l.b16 %v284
    %v460 = vunpack.c.h.b16 %v284
    %v461 = vunpack.c.l.b16 %v285
    %v462 = vunpack.c.h.b16 %v285
    %v463 = vunpack.c.l.b16 %v286
    %v464 = vunpack.c.h.b16 %v286
    %v465 = vunpack.c.l.b16 %v287
    %v466 = vunpack.c.h.b16 %v287
    %v467 = vunpack.c.l.b16 %v288
    %v468 = vunpack.c.h.b16 %v288
    %v469 = vunpack.c.l.b16 %v289
    %v470 = vunpack.c.h.b16 %v289
    %v471 = vunpack.c.l.b16 %v290
    %v472 = vunpack.c.h.b16 %v290
    %v473 = vunpack.c.l.b16 %v291
    %v474 = vunpack.c.h.b16 %v291
    %v475 = vunpack.c.l.b16 %v292
    %v476 = vunpack.c.h.b16 %v292
    %v477 = vunpack.c.l.b16 %v293
    %v478 = vunpack.c.h.b16 %v293
    %v479 = vunpack.c.l.b16 %v294
    %v480 = vunpack.c.h.b16 %v294
    %v481 = vunpack.c.l.b16 %v295
    %v482 = vunpack.c.h.b16 %v295
    %v483 = vunpack.c.l.b16 %v296
    %v484 = vunpack.c.h.b16 %v296
    %v485 = vunpack.c.l.b16 %v297
    %v486 = vunpack.c.h.b16 %v297
    %v487 = vunpack.c.l.b16 %v298
    %v488 = vunpack.c.h.b16 %v298
    %v489 = vunpack.c.l.b16 %v299
    %v490 = vunpack.c.h.b16 %v299
    %v491 = vunpack.c.l.b16 %v300
    %v492 = vunpack.c.h.b16 %v300
    %v493 = vunpack.c.l.b16 %v301
    %v494 = vunpack.c.h.b16 %v301
    %v495 = vunpack.c.l.b16 %v302
    %v496 = vunpack.c.h.b16 %v302
    %v497 = vunpack.c.l.b16 %v303
    %v498 = vunpack.c.h.b16 %v303
    %v499 = vunpack.c.l.b16 %v304
    %v500 = vunpack.c.h.b16 %v304
    %v501 = vunpack.c.l.b16 %v305
    %v502 = vunpack.c.h.b16 %v305
    %v503 = vunpack.c.l.b16 %v306
    %v504 = vunpack.c.h.b16 %v306
    %v505 = vunpack.c.l.b16 %v307
    %v506 = vunpack.c.h.b16 %v307
    %v507 = vunpack.c.l.b16 %v308
    %v508 = vunpack.c.h.b16 %v308
    %v509 = vunpack.c.l.b16 %v309
    %v510 = vunpack.c.h.b16 %v309
    %v511 = vunpack.c.l.b16 %v310
    %v512 = vunpack.c.h.b16 %v310
    %v513 = vunpack.c.l.b16 %v311
    %v514 = vunpack.c.h.b16 %v311
    %v515 = vunpack.c.l.b16 %v312
    %v516 = vunpack.c.h.b16 %v312
    %v517 = vunpack.c.l.b16 %v313
    %v518 = vunpack.c.h.b16 %v313
    %v519 = vunpack.c.l.b16 %v314
    %v520 = vunpack.c.h.b16 %v314
    %v521 = vunpack.c.l.b16 %v315
    %v522 = vunpack.c.h.b16 %v315
    %v523 = vunpack.c.l.b16 %v316
    %v524 = vunpack.c.h.b16 %v316
    %v525 = vunpack.c.l.b16 %v317
    %v526 = vunpack.c.h.b16 %v317
    %v527 = vunpack.c.l.b16 %v318
    %v528 = vunpack.c.h.b16 %v318
    %v529 = vunpack.c.l.b16 %v319
    %v530 = vunpack.c.h.b16 %v319
    %v531 = vunpack.c.l.b16 %v320
    %v532 = vunpack.c.h.b16 %v320
    %v533 = vunpack.c.l.b16 %v321
    %v534 = vunpack.c.h.b16 %v321
    %v535 = vunpack.c.l.b16 %v322
    %v536 = vunpack.c.h.b16 %v322
    %v537 = vpack.c.b16 %v413, %v409
    %v538 = vpack.c.b16 %v414, %v410
    %v539 = vpack.c.b16 %v415, %v411
    %v540 = vpack.c.b16 %v416, %v412
    %v541 = vpack.c.b16 %v421, %v417
    %v542 = vpack.c.b16 %v422, %v418
    %v543 = vpack.c.b16 %v423, %v419
    %v544 = vpack.c.b16 %v424, %v420
    %v545 = vpack.c.b16 %v429, %v425
    %v546 = vpack.c.b16 %v430, %v426
    %v547 = vpack.c.b16 %v431, %v427
    %v548 = vpack.c.b16 %v432, %v428
    %v549 = vpack.c.b16 %v437, %v433
    %v550 = vpack.c.b16 %v438, %v434
    %v551 = vpack.c.b16 %v439, %v435
    %v552 = vpack.c.b16 %v440, %v436
    %v553 = vpack.c.b16 %v445, %v441
    %v554 = vpack.c.b16 %v446, %v442
    %v555 = vpack.c.b16 %v447, %v443
    %v556 = vpack.c.b16 %v448, %v444
    %v557 = vpack.c.b16 %v453, %v449
    %v558 = vpack.c.b16 %v454, %v450
    %v559 = vpack.c.b16 %v455, %v451
    %v560 = vpack.c.b16 %v456, %v452
    %v561 = vpack.c.b16 %v461, %v457
    %v562 = vpack.c.b16 %v462, %v458
    %v563 = vpack.c.b16 %v463, %v459
    %v564 = vpack.c.b16 %v464, %v460
    %v565 = vpack.c.b16 %v469, %v465
    %v566 = vpack.c.b16 %v470, %v466
    %v567 = vpack.c.b16 %v471, %v467
    %v568 = vpack.c.b16 %v472, %v468
    %v569 = vpack.c.b16 %v477, %v473
    %v570 = vpack.c.b16 %v478, %v474
    %v571 = vpack.c.b16 %v479, %v475
    %v572 = vpack.c.b16 %v480, %v476
    %v573 = vpack.c.b16 %v485, %v481
    %v574 = vpack.c.b16 %v486, %v482
    %v575 = vpack.c.b16 %v487, %v483
    %v576 = vpack.c.b16 %v488, %v484
    %v577 = vpack.c.b16 %v493, %v489
    %v578 = vpack.c.b16 %v494, %v490
    %v579 = vpack.c.b16 %v495, %v491
    %v580 = vpack.c.b16 %v496, %v492
    %v581 = vpack.c.b16 %v501, %v497
    %v582 = vpack.c.b16 %v502, %v498
    %v583 = vpack.c.b16 %v503, %v499
    %v584 = vpack.c.b16 %v504, %v500
    %v585 = vpack.c.b16 %v509, %v505
    %v586 = vpack.c.b16 %v510, %v506
    %v587 = vpack.c.b16 %v511, %v507
    %v588 = vpack.c.b16 %v512, %v508
    %v589 = vpack.c.b16 %v517, %v513
    %v590 = vpack.c.b16 %v518, %v514
    %v591 = vpack.c.b16 %v519, %v515
    %v592 = vpack.c.b16 %v520, %v516
    %v593 = vpack.c.b16 %v525, %v521
    %v594 = vpack.c.b16 %v526, %v522
    %v595 = vpack.c.b16 %v527, %v523
    %v596 = vpack.c.b16 %v528, %v524
    %v597 = vpack.c.b16 %v533, %v529
    %v598 = vpack.c.b16 %v534, %v530
    %v599 = vpack.c.b16 %v535, %v531
    %v600 = vpack.c.b16 %v536, %v532
    %665 = vmatprep.subr.bf16.mxu0 %v538
    %666 = vmatpush1.bf16.msra.mxu0 %v537
    %667 = vmatprep.subr.bf16.mxu0 %v542
    %668 = vmatpush1.bf16.msra.mxu0 %v541
    %669 = vmatprep.subr.bf16.mxu0 %v546
    %670 = vmatpush1.bf16.msra.mxu0 %v545
    %671 = vmatprep.subr.bf16.mxu0 %v550
    %672 = vmatpush1.bf16.msra.mxu0 %v549
    %673 = vmatprep.subr.bf16.mxu0 %v554
    %674 = vmatpush1.bf16.msra.mxu0 %v553
    %675 = vmatprep.subr.bf16.mxu0 %v558
    %676 = vmatpush1.bf16.msra.mxu0 %v557
    %677 = vmatprep.subr.bf16.mxu0 %v562
    %678 = vmatpush1.bf16.msra.mxu0 %v561
    %679 = vmatprep.subr.bf16.mxu0 %v566
    %680 = vmatpush1.bf16.msra.mxu0 %v565
    %681 = vmatprep.subr.bf16.mxu0 %v570
    %682 = vmatpush1.bf16.msra.mxu0 %v569
    %683 = vmatprep.subr.bf16.mxu0 %v574
    %684 = vmatpush1.bf16.msra.mxu0 %v573
    %685 = vmatprep.subr.bf16.mxu0 %v578
    %686 = vmatpush1.bf16.msra.mxu0 %v577
    %687 = vmatprep.subr.bf16.mxu0 %v582
    %688 = vmatpush1.bf16.msra.mxu0 %v581
    %689 = vmatprep.subr.bf16.mxu0 %v586
    %690 = vmatpush1.bf16.msra.mxu0 %v585
    %691 = vmatprep.subr.bf16.mxu0 %v590
    %692 = vmatpush1.bf16.msra.mxu0 %v589
    %693 = vmatprep.subr.bf16.mxu0 %v594
    %694 = vmatpush1.bf16.msra.mxu0 %v593
    %695 = vmatprep.subr.bf16.mxu0 %v598
    %696 = vmatpush1.bf16.msra.mxu0 %v597
    %697 = vmatprep.mubr.bf16.mxu0 %v258
    %698 = vmatmul.mubr.bf16.gmra.mrb[0].mxu0 %v257
    %v699 = vpop.f32.mrb[0].mxu0
    %v700 = vadd.f32 %v328, %v699
    %v701 = vpop.f32.mrb[0].mxu0
    %v702 = vadd.f32 %v332, %v701
    %v703 = vpop.f32.mrb[0].mxu0
    %v704 = vadd.f32 %v328, %v703
    %v705 = vpop.f32.mrb[0].mxu0
    %v706 = vadd.f32 %v332, %v705
    %707 = vdwg.mxu0
    %708 = vmatprep.subr.bf16.mxu0 %v540
    %709 = vmatpush1.bf16.msra.mxu0 %v539
    %710 = vmatprep.subr.bf16.mxu0 %v544
    %711 = vmatpush1.bf16.msra.mxu0 %v543
    %712 = vmatprep.subr.bf16.mxu0 %v548
    %713 = vmatpush1.bf16.msra.mxu0 %v547
    %714 = vmatprep.subr.bf16.mxu0 %v552
    %715 = vmatpush1.bf16.msra.mxu0 %v551
    %716 = vmatprep.subr.bf16.mxu0 %v556
    %717 = vmatpush1.bf16.msra.mxu0 %v555
    %718 = vmatprep.subr.bf16.mxu0 %v560
    %719 = vmatpush1.bf16.msra.mxu0 %v559
    %720 = vmatprep.subr.bf16.mxu0 %v564
    %721 = vmatpush1.bf16.msra.mxu0 %v563
    %722 = vmatprep.subr.bf16.mxu0 %v568
    %723 = vmatpush1.bf16.msra.mxu0 %v567
    %724 = vmatprep.subr.bf16.mxu0 %v572
    %725 = vmatpush1.bf16.msra.mxu0 %v571
    %726 = vmatprep.subr.bf16.mxu0 %v576
    %727 = vmatpush1.bf16.msra.mxu0 %v575
    %728 = vmatprep.subr.bf16.mxu0 %v580
    %729 = vmatpush1.bf16.msra.mxu0 %v579
    %730 = vmatprep.subr.bf16.mxu0 %v584
    %731 = vmatpush1.bf16.msra.mxu0 %v583
    %732 = vmatprep.subr.bf16.mxu0 %v588
    %733 = vmatpush1.bf16.msra.mxu0 %v587
    %734 = vmatprep.subr.bf16.mxu0 %v592
    %735 = vmatpush1.bf16.msra.mxu0 %v591
    %736 = vmatprep.subr.bf16.mxu0 %v596
    %737 = vmatpush1.bf16.msra.mxu0 %v595
    %738 = vmatprep.subr.bf16.mxu0 %v600
    %739 = vmatpush1.bf16.msra.mxu0 %v599
    %740 = vmatprep.mubr.bf16.mxu0 %v258
    %741 = vmatmul.mubr.bf16.gmra.mrb[0].mxu0 %v257
    %v742 = vpop.f32.mrb[0].mxu0
    %v743 = vadd.f32 %v336, %v742
    %v744 = vpop.f32.mrb[0].mxu0
    %v745 = vadd.f32 %v340, %v744
    %v746 = vpop.f32.mrb[0].mxu0
    %v747 = vadd.f32 %v336, %v746
    %v748 = vpop.f32.mrb[0].mxu0
    %v749 = vadd.f32 %v340, %v748
    %750 = vdwg.mxu0
    %v751 = vmax.f32 %v700, 0.0
    %v752 = vmax.f32 %v702, 0.0
    %v753 = vmax.f32 %v743, 0.0
    %v754 = vmax.f32 %v745, 0.0
    %v755 = vmax.f32 %v704, 0.0
    %v756 = vmax.f32 %v706, 0.0
    %v757 = vmax.f32 %v747, 0.0
    %v758 = vmax.f32 %v749, 0.0
    %v759 = vpack.c.bf16 %v755, %v751
    %v760 = vpack.c.bf16 %v756, %v752
    %v761 = vpack.c.bf16 %v757, %v753
    %v762 = vpack.c.bf16 %v758, %v754
    %v763 = vld [vmem:[#allocation10] sm:$0xff]
    %v764 = vld [vmem:[#allocation10 + $0x8] sm:$0xff]
    %v765 = vld [vmem:[#allocation10 + $0x10] sm:$0xff]
    %v766 = vld [vmem:[#allocation10 + $0x18] sm:$0xff]
    %v767 = vld [vmem:[#allocation10 + $0x20] sm:$0xff]
    %v768 = vld [vmem:[#allocation10 + $0x28] sm:$0xff]
    %v769 = vld [vmem:[#allocation10 + $0x30] sm:$0xff]
    %v770 = vld [vmem:[#allocation10 + $0x38] sm:$0xff]
    %v771 = vld [vmem:[#allocation10 + $0x40] sm:$0xff]
    %v772 = vld [vmem:[#allocation10 + $0x48] sm:$0xff]
    %v773 = vld [vmem:[#allocation10 + $0x50] sm:$0xff]
    %v774 = vld [vmem:[#allocation10 + $0x58] sm:$0xff]
    %v775 = vld [vmem:[#allocation10 + $0x60] sm:$0xff]
    %v776 = vld [vmem:[#allocation10 + $0x68] sm:$0xff]
    %v777 = vld [vmem:[#allocation10 + $0x70] sm:$0xff]
    %v778 = vld [vmem:[#allocation10 + $0x78] sm:$0xff]
    %v779 = vld [vmem:[#allocation10 + $0x80] sm:$0xff]
    %v780 = vld [vmem:[#allocation10 + $0x88] sm:$0xff]
    %v781 = vld [vmem:[#allocation10 + $0x90] sm:$0xff]
    %v782 = vld [vmem:[#allocation10 + $0x98] sm:$0xff]
    %v783 = vld [vmem:[#allocation10 + $0xa0] sm:$0xff]
    %v784 = vld [vmem:[#allocation10 + $0xa8] sm:$0xff]
    %v785 = vld [vmem:[#allocation10 + $0xb0] sm:$0xff]
    %v786 = vld [vmem:[#allocation10 + $0xb8] sm:$0xff]
    %v787 = vld [vmem:[#allocation10 + $0xc0] sm:$0xff]
    %v788 = vld [vmem:[#allocation10 + $0xc8] sm:$0xff]
    %v789 = vld [vmem:[#allocation10 + $0xd0] sm:$0xff]
    %v790 = vld [vmem:[#allocation10 + $0xd8] sm:$0xff]
    %v791 = vld [vmem:[#allocation10 + $0xe0] sm:$0xff]
    %v792 = vld [vmem:[#allocation10 + $0xe8] sm:$0xff]
    %v793 = vld [vmem:[#allocation10 + $0xf0] sm:$0xff]
    %v794 = vld [vmem:[#allocation10 + $0xf8] sm:$0xff]
    %v795 = vld [vmem:[#allocation10 + $0x100] sm:$0xff]
    %v796 = vld [vmem:[#allocation10 + $0x108] sm:$0xff]
    %v797 = vld [vmem:[#allocation10 + $0x110] sm:$0xff]
    %v798 = vld [vmem:[#allocation10 + $0x118] sm:$0xff]
    %v799 = vld [vmem:[#allocation10 + $0x120] sm:$0xff]
    %v800 = vld [vmem:[#allocation10 + $0x128] sm:$0xff]
    %v801 = vld [vmem:[#allocation10 + $0x130] sm:$0xff]
    %v802 = vld [vmem:[#allocation10 + $0x138] sm:$0xff]
    %v803 = vld [vmem:[#allocation10 + $0x140] sm:$0xff]
    %v804 = vld [vmem:[#allocation10 + $0x148] sm:$0xff]
    %v805 = vld [vmem:[#allocation10 + $0x150] sm:$0xff]
    %v806 = vld [vmem:[#allocation10 + $0x158] sm:$0xff]
    %v807 = vld [vmem:[#allocation10 + $0x160] sm:$0xff]
    %v808 = vld [vmem:[#allocation10 + $0x168] sm:$0xff]
    %v809 = vld [vmem:[#allocation10 + $0x170] sm:$0xff]
    %v810 = vld [vmem:[#allocation10 + $0x178] sm:$0xff]
    %v811 = vld [vmem:[#allocation10 + $0x180] sm:$0xff]
    %v812 = vld [vmem:[#allocation10 + $0x188] sm:$0xff]
    %v813 = vld [vmem:[#allocation10 + $0x190] sm:$0xff]
    %v814 = vld [vmem:[#allocation10 + $0x198] sm:$0xff]
    %v815 = vld [vmem:[#allocation10 + $0x1a0] sm:$0xff]
    %v816 = vld [vmem:[#allocation10 + $0x1a8] sm:$0xff]
    %v817 = vld [vmem:[#allocation10 + $0x1b0] sm:$0xff]
    %v818 = vld [vmem:[#allocation10 + $0x1b8] sm:$0xff]
    %v819 = vld [vmem:[#allocation10 + $0x1c0] sm:$0xff]
    %v820 = vld [vmem:[#allocation10 + $0x1c8] sm:$0xff]
    %v821 = vld [vmem:[#allocation10 + $0x1d0] sm:$0xff]
    %v822 = vld [vmem:[#allocation10 + $0x1d8] sm:$0xff]
    %v823 = vld [vmem:[#allocation10 + $0x1e0] sm:$0xff]
    %v824 = vld [vmem:[#allocation10 + $0x1e8] sm:$0xff]
    %v825 = vld [vmem:[#allocation10 + $0x1f0] sm:$0xff]
    %v826 = vld [vmem:[#allocation10 + $0x1f8] sm:$0xff]
    %v827 = vld [vmem:[#allocation10 + $0x200] sm:$0xff]
    %v828 = vld [vmem:[#allocation10 + $0x208] sm:$0xff]
    %v829 = vld [vmem:[#allocation10 + $0x210] sm:$0xff]
    %v830 = vld [vmem:[#allocation10 + $0x218] sm:$0xff]
    %v831 = vld [vmem:[#allocation10 + $0x220] sm:$0xff]
    %v832 = vld [vmem:[#allocation10 + $0x228] sm:$0xff]
    %v833 = vld [vmem:[#allocation10 + $0x230] sm:$0xff]
    %v834 = vld [vmem:[#allocation10 + $0x238] sm:$0xff]
    %v835 = vld [vmem:[#allocation10 + $0x240] sm:$0xff]
    %v836 = vld [vmem:[#allocation10 + $0x248] sm:$0xff]
    %v837 = vld [vmem:[#allocation10 + $0x250] sm:$0xff]
    %v838 = vld [vmem:[#allocation10 + $0x258] sm:$0xff]
    %v839 = vld [vmem:[#allocation10 + $0x260] sm:$0xff]
    %v840 = vld [vmem:[#allocation10 + $0x268] sm:$0xff]
    %v841 = vld [vmem:[#allocation10 + $0x270] sm:$0xff]
    %v842 = vld [vmem:[#allocation10 + $0x278] sm:$0xff]
    %v843 = vld [vmem:[#allocation10 + $0x280] sm:$0xff]
    %v844 = vld [vmem:[#allocation10 + $0x288] sm:$0xff]
    %v845 = vld [vmem:[#allocation10 + $0x290] sm:$0xff]
    %v846 = vld [vmem:[#allocation10 + $0x298] sm:$0xff]
    %v847 = vld [vmem:[#allocation10 + $0x2a0] sm:$0xff]
    %v848 = vld [vmem:[#allocation10 + $0x2a8] sm:$0xff]
    %v849 = vld [vmem:[#allocation10 + $0x2b0] sm:$0xff]
    %v850 = vld [vmem:[#allocation10 + $0x2b8] sm:$0xff]
    %v851 = vld [vmem:[#allocation10 + $0x2c0] sm:$0xff]
    %v852 = vld [vmem:[#allocation10 + $0x2c8] sm:$0xff]
    %v853 = vld [vmem:[#allocation10 + $0x2d0] sm:$0xff]
    %v854 = vld [vmem:[#allocation10 + $0x2d8] sm:$0xff]
    %v855 = vld [vmem:[#allocation10 + $0x2e0] sm:$0xff]
    %v856 = vld [vmem:[#allocation10 + $0x2e8] sm:$0xff]
    %v857 = vld [vmem:[#allocation10 + $0x2f0] sm:$0xff]
    %v858 = vld [vmem:[#allocation10 + $0x2f8] sm:$0xff]
    %v859 = vld [vmem:[#allocation10 + $0x300] sm:$0xff]
    %v860 = vld [vmem:[#allocation10 + $0x308] sm:$0xff]
    %v861 = vld [vmem:[#allocation10 + $0x310] sm:$0xff]
    %v862 = vld [vmem:[#allocation10 + $0x318] sm:$0xff]
    %v863 = vld [vmem:[#allocation10 + $0x320] sm:$0xff]
    %v864 = vld [vmem:[#allocation10 + $0x328] sm:$0xff]
    %v865 = vld [vmem:[#allocation10 + $0x330] sm:$0xff]
    %v866 = vld [vmem:[#allocation10 + $0x338] sm:$0xff]
    %v867 = vld [vmem:[#allocation10 + $0x340] sm:$0xff]
    %v868 = vld [vmem:[#allocation10 + $0x348] sm:$0xff]
    %v869 = vld [vmem:[#allocation10 + $0x350] sm:$0xff]
    %v870 = vld [vmem:[#allocation10 + $0x358] sm:$0xff]
    %v871 = vld [vmem:[#allocation10 + $0x360] sm:$0xff]
    %v872 = vld [vmem:[#allocation10 + $0x368] sm:$0xff]
    %v873 = vld [vmem:[#allocation10 + $0x370] sm:$0xff]
    %v874 = vld [vmem:[#allocation10 + $0x378] sm:$0xff]
    %v875 = vld [vmem:[#allocation10 + $0x380] sm:$0xff]
    %v876 = vld [vmem:[#allocation10 + $0x388] sm:$0xff]
    %v877 = vld [vmem:[#allocation10 + $0x390] sm:$0xff]
    %v878 = vld [vmem:[#allocation10 + $0x398] sm:$0xff]
    %v879 = vld [vmem:[#allocation10 + $0x3a0] sm:$0xff]
    %v880 = vld [vmem:[#allocation10 + $0x3a8] sm:$0xff]
    %v881 = vld [vmem:[#allocation10 + $0x3b0] sm:$0xff]
    %v882 = vld [vmem:[#allocation10 + $0x3b8] sm:$0xff]
    %v883 = vld [vmem:[#allocation10 + $0x3c0] sm:$0xff]
    %v884 = vld [vmem:[#allocation10 + $0x3c8] sm:$0xff]
    %v885 = vld [vmem:[#allocation10 + $0x3d0] sm:$0xff]
    %v886 = vld [vmem:[#allocation10 + $0x3d8] sm:$0xff]
    %v887 = vld [vmem:[#allocation10 + $0x3e0] sm:$0xff]
    %v888 = vld [vmem:[#allocation10 + $0x3e8] sm:$0xff]
    %v889 = vld [vmem:[#allocation10 + $0x3f0] sm:$0xff]
    %v890 = vld [vmem:[#allocation10 + $0x3f8] sm:$0xff]
    %v891 = vld [vmem:[#allocation10 + $0x400] sm:$0xff]
    %v892 = vld [vmem:[#allocation10 + $0x408] sm:$0xff]
    %v893 = vld [vmem:[#allocation10 + $0x410] sm:$0xff]
    %v894 = vld [vmem:[#allocation10 + $0x418] sm:$0xff]
    %v895 = vld [vmem:[#allocation10 + $0x420] sm:$0xff]
    %v896 = vld [vmem:[#allocation10 + $0x428] sm:$0xff]
    %v897 = vld [vmem:[#allocation10 + $0x430] sm:$0xff]
    %v898 = vld [vmem:[#allocation10 + $0x438] sm:$0xff]
    %v899 = vld [vmem:[#allocation10 + $0x440] sm:$0xff]
    %v900 = vld [vmem:[#allocation10 + $0x448] sm:$0xff]
    %v901 = vld [vmem:[#allocation10 + $0x450] sm:$0xff]
    %v902 = vld [vmem:[#allocation10 + $0x458] sm:$0xff]
    %v903 = vld [vmem:[#allocation10 + $0x460] sm:$0xff]
    %v904 = vld [vmem:[#allocation10 + $0x468] sm:$0xff]
    %v905 = vld [vmem:[#allocation10 + $0x470] sm:$0xff]
    %v906 = vld [vmem:[#allocation10 + $0x478] sm:$0xff]
    %v907 = vld [vmem:[#allocation10 + $0x480] sm:$0xff]
    %v908 = vld [vmem:[#allocation10 + $0x488] sm:$0xff]
    %v909 = vld [vmem:[#allocation10 + $0x490] sm:$0xff]
    %v910 = vld [vmem:[#allocation10 + $0x498] sm:$0xff]
    %v911 = vld [vmem:[#allocation10 + $0x4a0] sm:$0xff]
    %v912 = vld [vmem:[#allocation10 + $0x4a8] sm:$0xff]
    %v913 = vld [vmem:[#allocation10 + $0x4b0] sm:$0xff]
    %v914 = vld [vmem:[#allocation10 + $0x4b8] sm:$0xff]
    %v915 = vld [vmem:[#allocation10 + $0x4c0] sm:$0xff]
    %v916 = vld [vmem:[#allocation10 + $0x4c8] sm:$0xff]
    %v917 = vld [vmem:[#allocation10 + $0x4d0] sm:$0xff]
    %v918 = vld [vmem:[#allocation10 + $0x4d8] sm:$0xff]
    %v919 = vld [vmem:[#allocation10 + $0x4e0] sm:$0xff]
    %v920 = vld [vmem:[#allocation10 + $0x4e8] sm:$0xff]
    %v921 = vld [vmem:[#allocation10 + $0x4f0] sm:$0xff]
    %v922 = vld [vmem:[#allocation10 + $0x4f8] sm:$0xff]
    %v923 = vld [vmem:[#allocation10 + $0x500] sm:$0xff]
    %v924 = vld [vmem:[#allocation10 + $0x508] sm:$0xff]
    %v925 = vld [vmem:[#allocation10 + $0x510] sm:$0xff]
    %v926 = vld [vmem:[#allocation10 + $0x518] sm:$0xff]
    %v927 = vld [vmem:[#allocation10 + $0x520] sm:$0xff]
    %v928 = vld [vmem:[#allocation10 + $0x528] sm:$0xff]
    %v929 = vld [vmem:[#allocation10 + $0x530] sm:$0xff]
    %v930 = vld [vmem:[#allocation10 + $0x538] sm:$0xff]
    %v931 = vld [vmem:[#allocation10 + $0x540] sm:$0xff]
    %v932 = vld [vmem:[#allocation10 + $0x548] sm:$0xff]
    %v933 = vld [vmem:[#allocation10 + $0x550] sm:$0xff]
    %v934 = vld [vmem:[#allocation10 + $0x558] sm:$0xff]
    %v935 = vld [vmem:[#allocation10 + $0x560] sm:$0xff]
    %v936 = vld [vmem:[#allocation10 + $0x568] sm:$0xff]
    %v937 = vld [vmem:[#allocation10 + $0x570] sm:$0xff]
    %v938 = vld [vmem:[#allocation10 + $0x578] sm:$0xff]
    %v939 = vld [vmem:[#allocation10 + $0x580] sm:$0xff]
    %v940 = vld [vmem:[#allocation10 + $0x588] sm:$0xff]
    %v941 = vld [vmem:[#allocation10 + $0x590] sm:$0xff]
    %v942 = vld [vmem:[#allocation10 + $0x598] sm:$0xff]
    %v943 = vld [vmem:[#allocation10 + $0x5a0] sm:$0xff]
    %v944 = vld [vmem:[#allocation10 + $0x5a8] sm:$0xff]
    %v945 = vld [vmem:[#allocation10 + $0x5b0] sm:$0xff]
    %v946 = vld [vmem:[#allocation10 + $0x5b8] sm:$0xff]
    %v947 = vld [vmem:[#allocation10 + $0x5c0] sm:$0xff]
    %v948 = vld [vmem:[#allocation10 + $0x5c8] sm:$0xff]
    %v949 = vld [vmem:[#allocation10 + $0x5d0] sm:$0xff]
    %v950 = vld [vmem:[#allocation10 + $0x5d8] sm:$0xff]
    %v951 = vld [vmem:[#allocation10 + $0x5e0] sm:$0xff]
    %v952 = vld [vmem:[#allocation10 + $0x5e8] sm:$0xff]
    %v953 = vld [vmem:[#allocation10 + $0x5f0] sm:$0xff]
    %v954 = vld [vmem:[#allocation10 + $0x5f8] sm:$0xff]
    %v955 = vld [vmem:[%s6] sm:$0x3f]
    %v957 = vlaneseq
    %v958 = vshrl.u32 %v957, 7
    %v959 = vsub.s32 0, %v958
    %v960 = vrot.slane %v955, %v959
    %v961 = vlaneseq
    %v962 = vshrl.u32 %v961, 7
    %v963 = vsub.s32 1, %v962
    %v964 = vrot.slane %v955, %v963
    %v965 = vlaneseq
    %v966 = vshrl.u32 %v965, 7
    %v967 = vsub.s32 2, %v966
    %v968 = vrot.slane %v955, %v967
    %v969 = vlaneseq
    %v970 = vshrl.u32 %v969, 7
    %v971 = vsub.s32 3, %v970
    %v972 = vrot.slane %v955, %v971
    %v973 = vlaneseq
    %v974 = vshrl.u32 %v973, 7
    %v975 = vsub.s32 4, %v974
    %v976 = vrot.slane %v955, %v975
    %v977 = vlaneseq
    %v978 = vshrl.u32 %v977, 7
    %v979 = vsub.s32 5, %v978
    %v980 = vrot.slane %v955, %v979
    %v1179 = vunpack.c.l.b16 %v763
    %v1180 = vunpack.c.h.b16 %v763
    %v1181 = vunpack.c.l.b16 %v764
    %v1182 = vunpack.c.h.b16 %v764
    %v1183 = vunpack.c.l.b16 %v765
    %v1184 = vunpack.c.h.b16 %v765
    %v1185 = vunpack.c.l.b16 %v766
    %v1186 = vunpack.c.h.b16 %v766
    %v1187 = vunpack.c.l.b16 %v767
    %v1188 = vunpack.c.h.b16 %v767
    %v1189 = vunpack.c.l.b16 %v768
    %v1190 = vunpack.c.h.b16 %v768
    %v1191 = vunpack.c.l.b16 %v769
    %v1192 = vunpack.c.h.b16 %v769
    %v1193 = vunpack.c.l.b16 %v770
    %v1194 = vunpack.c.h.b16 %v770
    %v1195 = vunpack.c.l.b16 %v771
    %v1196 = vunpack.c.h.b16 %v771
    %v1197 = vunpack.c.l.b16 %v772
    %v1198 = vunpack.c.h.b16 %v772
    %v1199 = vunpack.c.l.b16 %v773
    %v1200 = vunpack.c.h.b16 %v773
    %v1201 = vunpack.c.l.b16 %v774
    %v1202 = vunpack.c.h.b16 %v774
    %v1203 = vunpack.c.l.b16 %v775
    %v1204 = vunpack.c.h.b16 %v775
    %v1205 = vunpack.c.l.b16 %v776
    %v1206 = vunpack.c.h.b16 %v776
    %v1207 = vunpack.c.l.b16 %v777
    %v1208 = vunpack.c.h.b16 %v777
    %v1209 = vunpack.c.l.b16 %v778
    %v1210 = vunpack.c.h.b16 %v778
    %v1211 = vunpack.c.l.b16 %v779
    %v1212 = vunpack.c.h.b16 %v779
    %v1213 = vunpack.c.l.b16 %v780
    %v1214 = vunpack.c.h.b16 %v780
    %v1215 = vunpack.c.l.b16 %v781
    %v1216 = vunpack.c.h.b16 %v781
    %v1217 = vunpack.c.l.b16 %v782
    %v1218 = vunpack.c.h.b16 %v782
    %v1219 = vunpack.c.l.b16 %v783
    %v1220 = vunpack.c.h.b16 %v783
    %v1221 = vunpack.c.l.b16 %v784
    %v1222 = vunpack.c.h.b16 %v784
    %v1223 = vunpack.c.l.b16 %v785
    %v1224 = vunpack.c.h.b16 %v785
    %v1225 = vunpack.c.l.b16 %v786
    %v1226 = vunpack.c.h.b16 %v786
    %v1227 = vunpack.c.l.b16 %v787
    %v1228 = vunpack.c.h.b16 %v787
    %v1229 = vunpack.c.l.b16 %v788
    %v1230 = vunpack.c.h.b16 %v788
    %v1231 = vunpack.c.l.b16 %v789
    %v1232 = vunpack.c.h.b16 %v789
    %v1233 = vunpack.c.l.b16 %v790
    %v1234 = vunpack.c.h.b16 %v790
    %v1235 = vunpack.c.l.b16 %v791
    %v1236 = vunpack.c.h.b16 %v791
    %v1237 = vunpack.c.l.b16 %v792
    %v1238 = vunpack.c.h.b16 %v792
    %v1239 = vunpack.c.l.b16 %v793
    %v1240 = vunpack.c.h.b16 %v793
    %v1241 = vunpack.c.l.b16 %v794
    %v1242 = vunpack.c.h.b16 %v794
    %v1243 = vunpack.c.l.b16 %v795
    %v1244 = vunpack.c.h.b16 %v795
    %v1245 = vunpack.c.l.b16 %v796
    %v1246 = vunpack.c.h.b16 %v796
    %v1247 = vunpack.c.l.b16 %v797
    %v1248 = vunpack.c.h.b16 %v797
    %v1249 = vunpack.c.l.b16 %v798
    %v1250 = vunpack.c.h.b16 %v798
    %v1251 = vunpack.c.l.b16 %v799
    %v1252 = vunpack.c.h.b16 %v799
    %v1253 = vunpack.c.l.b16 %v800
    %v1254 = vunpack.c.h.b16 %v800
    %v1255 = vunpack.c.l.b16 %v801
    %v1256 = vunpack.c.h.b16 %v801
    %v1257 = vunpack.c.l.b16 %v802
    %v1258 = vunpack.c.h.b16 %v802
    %v1259 = vunpack.c.l.b16 %v803
    %v1260 = vunpack.c.h.b16 %v803
    %v1261 = vunpack.c.l.b16 %v804
    %v1262 = vunpack.c.h.b16 %v804
    %v1263 = vunpack.c.l.b16 %v805
    %v1264 = vunpack.c.h.b16 %v805
    %v1265 = vunpack.c.l.b16 %v806
    %v1266 = vunpack.c.h.b16 %v806
    %v1267 = vunpack.c.l.b16 %v807
    %v1268 = vunpack.c.h.b16 %v807
    %v1269 = vunpack.c.l.b16 %v808
    %v1270 = vunpack.c.h.b16 %v808
    %v1271 = vunpack.c.l.b16 %v809
    %v1272 = vunpack.c.h.b16 %v809
    %v1273 = vunpack.c.l.b16 %v810
    %v1274 = vunpack.c.h.b16 %v810
    %v1275 = vunpack.c.l.b16 %v811
    %v1276 = vunpack.c.h.b16 %v811
    %v1277 = vunpack.c.l.b16 %v812
    %v1278 = vunpack.c.h.b16 %v812
    %v1279 = vunpack.c.l.b16 %v813
    %v1280 = vunpack.c.h.b16 %v813
    %v1281 = vunpack.c.l.b16 %v814
    %v1282 = vunpack.c.h.b16 %v814
    %v1283 = vunpack.c.l.b16 %v815
    %v1284 = vunpack.c.h.b16 %v815
    %v1285 = vunpack.c.l.b16 %v816
    %v1286 = vunpack.c.h.b16 %v816
    %v1287 = vunpack.c.l.b16 %v817
    %v1288 = vunpack.c.h.b16 %v817
    %v1289 = vunpack.c.l.b16 %v818
    %v1290 = vunpack.c.h.b16 %v818
    %v1291 = vunpack.c.l.b16 %v819
    %v1292 = vunpack.c.h.b16 %v819
    %v1293 = vunpack.c.l.b16 %v820
    %v1294 = vunpack.c.h.b16 %v820
    %v1295 = vunpack.c.l.b16 %v821
    %v1296 = vunpack.c.h.b16 %v821
    %v1297 = vunpack.c.l.b16 %v822
    %v1298 = vunpack.c.h.b16 %v822
    %v1299 = vunpack.c.l.b16 %v823
    %v1300 = vunpack.c.h.b16 %v823
    %v1301 = vunpack.c.l.b16 %v824
    %v1302 = vunpack.c.h.b16 %v824
    %v1303 = vunpack.c.l.b16 %v825
    %v1304 = vunpack.c.h.b16 %v825
    %v1305 = vunpack.c.l.b16 %v826
    %v1306 = vunpack.c.h.b16 %v826
    %v1307 = vunpack.c.l.b16 %v827
    %v1308 = vunpack.c.h.b16 %v827
    %v1309 = vunpack.c.l.b16 %v828
    %v1310 = vunpack.c.h.b16 %v828
    %v1311 = vunpack.c.l.b16 %v829
    %v1312 = vunpack.c.h.b16 %v829
    %v1313 = vunpack.c.l.b16 %v830
    %v1314 = vunpack.c.h.b16 %v830
    %v1315 = vunpack.c.l.b16 %v831
    %v1316 = vunpack.c.h.b16 %v831
    %v1317 = vunpack.c.l.b16 %v832
    %v1318 = vunpack.c.h.b16 %v832
    %v1319 = vunpack.c.l.b16 %v833
    %v1320 = vunpack.c.h.b16 %v833
    %v1321 = vunpack.c.l.b16 %v834
    %v1322 = vunpack.c.h.b16 %v834
    %v1323 = vunpack.c.l.b16 %v835
    %v1324 = vunpack.c.h.b16 %v835
    %v1325 = vunpack.c.l.b16 %v836
    %v1326 = vunpack.c.h.b16 %v836
    %v1327 = vunpack.c.l.b16 %v837
    %v1328 = vunpack.c.h.b16 %v837
    %v1329 = vunpack.c.l.b16 %v838
    %v1330 = vunpack.c.h.b16 %v838
    %v1331 = vunpack.c.l.b16 %v839
    %v1332 = vunpack.c.h.b16 %v839
    %v1333 = vunpack.c.l.b16 %v840
    %v1334 = vunpack.c.h.b16 %v840
    %v1335 = vunpack.c.l.b16 %v841
    %v1336 = vunpack.c.h.b16 %v841
    %v1337 = vunpack.c.l.b16 %v842
    %v1338 = vunpack.c.h.b16 %v842
    %v1339 = vunpack.c.l.b16 %v843
    %v1340 = vunpack.c.h.b16 %v843
    %v1341 = vunpack.c.l.b16 %v844
    %v1342 = vunpack.c.h.b16 %v844
    %v1343 = vunpack.c.l.b16 %v845
    %v1344 = vunpack.c.h.b16 %v845
    %v1345 = vunpack.c.l.b16 %v846
    %v1346 = vunpack.c.h.b16 %v846
    %v1347 = vunpack.c.l.b16 %v847
    %v1348 = vunpack.c.h.b16 %v847
    %v1349 = vunpack.c.l.b16 %v848
    %v1350 = vunpack.c.h.b16 %v848
    %v1351 = vunpack.c.l.b16 %v849
    %v1352 = vunpack.c.h.b16 %v849
    %v1353 = vunpack.c.l.b16 %v850
    %v1354 = vunpack.c.h.b16 %v850
    %v1355 = vunpack.c.l.b16 %v851
    %v1356 = vunpack.c.h.b16 %v851
    %v1357 = vunpack.c.l.b16 %v852
    %v1358 = vunpack.c.h.b16 %v852
    %v1359 = vunpack.c.l.b16 %v853
    %v1360 = vunpack.c.h.b16 %v853
    %v1361 = vunpack.c.l.b16 %v854
    %v1362 = vunpack.c.h.b16 %v854
    %v1363 = vunpack.c.l.b16 %v855
    %v1364 = vunpack.c.h.b16 %v855
    %v1365 = vunpack.c.l.b16 %v856
    %v1366 = vunpack.c.h.b16 %v856
    %v1367 = vunpack.c.l.b16 %v857
    %v1368 = vunpack.c.h.b16 %v857
    %v1369 = vunpack.c.l.b16 %v858
    %v1370 = vunpack.c.h.b16 %v858
    %v1371 = vunpack.c.l.b16 %v859
    %v1372 = vunpack.c.h.b16 %v859
    %v1373 = vunpack.c.l.b16 %v860
    %v1374 = vunpack.c.h.b16 %v860
    %v1375 = vunpack.c.l.b16 %v861
    %v1376 = vunpack.c.h.b16 %v861
    %v1377 = vunpack.c.l.b16 %v862
    %v1378 = vunpack.c.h.b16 %v862
    %v1379 = vunpack.c.l.b16 %v863
    %v1380 = vunpack.c.h.b16 %v863
    %v1381 = vunpack.c.l.b16 %v864
    %v1382 = vunpack.c.h.b16 %v864
    %v1383 = vunpack.c.l.b16 %v865
    %v1384 = vunpack.c.h.b16 %v865
    %v1385 = vunpack.c.l.b16 %v866
    %v1386 = vunpack.c.h.b16 %v866
    %v1387 = vunpack.c.l.b16 %v867
    %v1388 = vunpack.c.h.b16 %v867
    %v1389 = vunpack.c.l.b16 %v868
    %v1390 = vunpack.c.h.b16 %v868
    %v1391 = vunpack.c.l.b16 %v869
    %v1392 = vunpack.c.h.b16 %v869
    %v1393 = vunpack.c.l.b16 %v870
    %v1394 = vunpack.c.h.b16 %v870
    %v1395 = vunpack.c.l.b16 %v871
    %v1396 = vunpack.c.h.b16 %v871
    %v1397 = vunpack.c.l.b16 %v872
    %v1398 = vunpack.c.h.b16 %v872
    %v1399 = vunpack.c.l.b16 %v873
    %v1400 = vunpack.c.h.b16 %v873
    %v1401 = vunpack.c.l.b16 %v874
    %v1402 = vunpack.c.h.b16 %v874
    %v1403 = vunpack.c.l.b16 %v875
    %v1404 = vunpack.c.h.b16 %v875
    %v1405 = vunpack.c.l.b16 %v876
    %v1406 = vunpack.c.h.b16 %v876
    %v1407 = vunpack.c.l.b16 %v877
    %v1408 = vunpack.c.h.b16 %v877
    %v1409 = vunpack.c.l.b16 %v878
    %v1410 = vunpack.c.h.b16 %v878
    %v1411 = vunpack.c.l.b16 %v879
    %v1412 = vunpack.c.h.b16 %v879
    %v1413 = vunpack.c.l.b16 %v880
    %v1414 = vunpack.c.h.b16 %v880
    %v1415 = vunpack.c.l.b16 %v881
    %v1416 = vunpack.c.h.b16 %v881
    %v1417 = vunpack.c.l.b16 %v882
    %v1418 = vunpack.c.h.b16 %v882
    %v1419 = vunpack.c.l.b16 %v883
    %v1420 = vunpack.c.h.b16 %v883
    %v1421 = vunpack.c.l.b16 %v884
    %v1422 = vunpack.c.h.b16 %v884
    %v1423 = vunpack.c.l.b16 %v885
    %v1424 = vunpack.c.h.b16 %v885
    %v1425 = vunpack.c.l.b16 %v886
    %v1426 = vunpack.c.h.b16 %v886
    %v1427 = vunpack.c.l.b16 %v887
    %v1428 = vunpack.c.h.b16 %v887
    %v1429 = vunpack.c.l.b16 %v888
    %v1430 = vunpack.c.h.b16 %v888
    %v1431 = vunpack.c.l.b16 %v889
    %v1432 = vunpack.c.h.b16 %v889
    %v1433 = vunpack.c.l.b16 %v890
    %v1434 = vunpack.c.h.b16 %v890
    %v1435 = vunpack.c.l.b16 %v891
    %v1436 = vunpack.c.h.b16 %v891
    %v1437 = vunpack.c.l.b16 %v892
    %v1438 = vunpack.c.h.b16 %v892
    %v1439 = vunpack.c.l.b16 %v893
    %v1440 = vunpack.c.h.b16 %v893
    %v1441 = vunpack.c.l.b16 %v894
    %v1442 = vunpack.c.h.b16 %v894
    %v1443 = vunpack.c.l.b16 %v895
    %v1444 = vunpack.c.h.b16 %v895
    %v1445 = vunpack.c.l.b16 %v896
    %v1446 = vunpack.c.h.b16 %v896
    %v1447 = vunpack.c.l.b16 %v897
    %v1448 = vunpack.c.h.b16 %v897
    %v1449 = vunpack.c.l.b16 %v898
    %v1450 = vunpack.c.h.b16 %v898
    %v1451 = vunpack.c.l.b16 %v899
    %v1452 = vunpack.c.h.b16 %v899
    %v1453 = vunpack.c.l.b16 %v900
    %v1454 = vunpack.c.h.b16 %v900
    %v1455 = vunpack.c.l.b16 %v901
    %v1456 = vunpack.c.h.b16 %v901
    %v1457 = vunpack.c.l.b16 %v902
    %v1458 = vunpack.c.h.b16 %v902
    %v1459 = vunpack.c.l.b16 %v903
    %v1460 = vunpack.c.h.b16 %v903
    %v1461 = vunpack.c.l.b16 %v904
    %v1462 = vunpack.c.h.b16 %v904
    %v1463 = vunpack.c.l.b16 %v905
    %v1464 = vunpack.c.h.b16 %v905
    %v1465 = vunpack.c.l.b16 %v906
    %v1466 = vunpack.c.h.b16 %v906
    %v1467 = vunpack.c.l.b16 %v907
    %v1468 = vunpack.c.h.b16 %v907
    %v1469 = vunpack.c.l.b16 %v908
    %v1470 = vunpack.c.h.b16 %v908
    %v1471 = vunpack.c.l.b16 %v909
    %v1472 = vunpack.c.h.b16 %v909
    %v1473 = vunpack.c.l.b16 %v910
    %v1474 = vunpack.c.h.b16 %v910
    %v1475 = vunpack.c.l.b16 %v911
    %v1476 = vunpack.c.h.b16 %v911
    %v1477 = vunpack.c.l.b16 %v912
    %v1478 = vunpack.c.h.b16 %v912
    %v1479 = vunpack.c.l.b16 %v913
    %v1480 = vunpack.c.h.b16 %v913
    %v1481 = vunpack.c.l.b16 %v914
    %v1482 = vunpack.c.h.b16 %v914
    %v1483 = vunpack.c.l.b16 %v915
    %v1484 = vunpack.c.h.b16 %v915
    %v1485 = vunpack.c.l.b16 %v916
    %v1486 = vunpack.c.h.b16 %v916
    %v1487 = vunpack.c.l.b16 %v917
    %v1488 = vunpack.c.h.b16 %v917
    %v1489 = vunpack.c.l.b16 %v918
    %v1490 = vunpack.c.h.b16 %v918
    %v1491 = vunpack.c.l.b16 %v919
    %v1492 = vunpack.c.h.b16 %v919
    %v1493 = vunpack.c.l.b16 %v920
    %v1494 = vunpack.c.h.b16 %v920
    %v1495 = vunpack.c.l.b16 %v921
    %v1496 = vunpack.c.h.b16 %v921
    %v1497 = vunpack.c.l.b16 %v922
    %v1498 = vunpack.c.h.b16 %v922
    %v1499 = vunpack.c.l.b16 %v923
    %v1500 = vunpack.c.h.b16 %v923
    %v1501 = vunpack.c.l.b16 %v924
    %v1502 = vunpack.c.h.b16 %v924
    %v1503 = vunpack.c.l.b16 %v925
    %v1504 = vunpack.c.h.b16 %v925
    %v1505 = vunpack.c.l.b16 %v926
    %v1506 = vunpack.c.h.b16 %v926
    %v1507 = vunpack.c.l.b16 %v927
    %v1508 = vunpack.c.h.b16 %v927
    %v1509 = vunpack.c.l.b16 %v928
    %v1510 = vunpack.c.h.b16 %v928
    %v1511 = vunpack.c.l.b16 %v929
    %v1512 = vunpack.c.h.b16 %v929
    %v1513 = vunpack.c.l.b16 %v930
    %v1514 = vunpack.c.h.b16 %v930
    %v1515 = vunpack.c.l.b16 %v931
    %v1516 = vunpack.c.h.b16 %v931
    %v1517 = vunpack.c.l.b16 %v932
    %v1518 = vunpack.c.h.b16 %v932
    %v1519 = vunpack.c.l.b16 %v933
    %v1520 = vunpack.c.h.b16 %v933
    %v1521 = vunpack.c.l.b16 %v934
    %v1522 = vunpack.c.h.b16 %v934
    %v1523 = vunpack.c.l.b16 %v935
    %v1524 = vunpack.c.h.b16 %v935
    %v1525 = vunpack.c.l.b16 %v936
    %v1526 = vunpack.c.h.b16 %v936
    %v1527 = vunpack.c.l.b16 %v937
    %v1528 = vunpack.c.h.b16 %v937
    %v1529 = vunpack.c.l.b16 %v938
    %v1530 = vunpack.c.h.b16 %v938
    %v1531 = vunpack.c.l.b16 %v939
    %v1532 = vunpack.c.h.b16 %v939
    %v1533 = vunpack.c.l.b16 %v940
    %v1534 = vunpack.c.h.b16 %v940
    %v1535 = vunpack.c.l.b16 %v941
    %v1536 = vunpack.c.h.b16 %v941
    %v1537 = vunpack.c.l.b16 %v942
    %v1538 = vunpack.c.h.b16 %v942
    %v1539 = vunpack.c.l.b16 %v943
    %v1540 = vunpack.c.h.b16 %v943
    %v1541 = vunpack.c.l.b16 %v944
    %v1542 = vunpack.c.h.b16 %v944
    %v1543 = vunpack.c.l.b16 %v945
    %v1544 = vunpack.c.h.b16 %v945
    %v1545 = vunpack.c.l.b16 %v946
    %v1546 = vunpack.c.h.b16 %v946
    %v1547 = vunpack.c.l.b16 %v947
    %v1548 = vunpack.c.h.b16 %v947
    %v1549 = vunpack.c.l.b16 %v948
    %v1550 = vunpack.c.h.b16 %v948
    %v1551 = vunpack.c.l.b16 %v949
    %v1552 = vunpack.c.h.b16 %v949
    %v1553 = vunpack.c.l.b16 %v950
    %v1554 = vunpack.c.h.b16 %v950
    %v1555 = vunpack.c.l.b16 %v951
    %v1556 = vunpack.c.h.b16 %v951
    %v1557 = vunpack.c.l.b16 %v952
    %v1558 = vunpack.c.h.b16 %v952
    %v1559 = vunpack.c.l.b16 %v953
    %v1560 = vunpack.c.h.b16 %v953
    %v1561 = vunpack.c.l.b16 %v954
    %v1562 = vunpack.c.h.b16 %v954
    %v1563 = vpack.c.b16 %v1185, %v1179
    %v1564 = vpack.c.b16 %v1186, %v1180
    %v1565 = vpack.c.b16 %v1187, %v1181
    %v1566 = vpack.c.b16 %v1188, %v1182
    %v1567 = vpack.c.b16 %v1189, %v1183
    %v1568 = vpack.c.b16 %v1190, %v1184
    %v1569 = vpack.c.b16 %v1197, %v1191
    %v1570 = vpack.c.b16 %v1198, %v1192
    %v1571 = vpack.c.b16 %v1199, %v1193
    %v1572 = vpack.c.b16 %v1200, %v1194
    %v1573 = vpack.c.b16 %v1201, %v1195
    %v1574 = vpack.c.b16 %v1202, %v1196
    %v1575 = vpack.c.b16 %v1209, %v1203
    %v1576 = vpack.c.b16 %v1210, %v1204
    %v1577 = vpack.c.b16 %v1211, %v1205
    %v1578 = vpack.c.b16 %v1212, %v1206
    %v1579 = vpack.c.b16 %v1213, %v1207
    %v1580 = vpack.c.b16 %v1214, %v1208
    %v1581 = vpack.c.b16 %v1221, %v1215
    %v1582 = vpack.c.b16 %v1222, %v1216
    %v1583 = vpack.c.b16 %v1223, %v1217
    %v1584 = vpack.c.b16 %v1224, %v1218
    %v1585 = vpack.c.b16 %v1225, %v1219
    %v1586 = vpack.c.b16 %v1226, %v1220
    %v1587 = vpack.c.b16 %v1233, %v1227
    %v1588 = vpack.c.b16 %v1234, %v1228
    %v1589 = vpack.c.b16 %v1235, %v1229
    %v1590 = vpack.c.b16 %v1236, %v1230
    %v1591 = vpack.c.b16 %v1237, %v1231
    %v1592 = vpack.c.b16 %v1238, %v1232
    %v1593 = vpack.c.b16 %v1245, %v1239
    %v1594 = vpack.c.b16 %v1246, %v1240
    %v1595 = vpack.c.b16 %v1247, %v1241
    %v1596 = vpack.c.b16 %v1248, %v1242
    %v1597 = vpack.c.b16 %v1249, %v1243
    %v1598 = vpack.c.b16 %v1250, %v1244
    %v1599 = vpack.c.b16 %v1257, %v1251
    %v1600 = vpack.c.b16 %v1258, %v1252
    %v1601 = vpack.c.b16 %v1259, %v1253
    %v1602 = vpack.c.b16 %v1260, %v1254
    %v1603 = vpack.c.b16 %v1261, %v1255
    %v1604 = vpack.c.b16 %v1262, %v1256
    %v1605 = vpack.c.b16 %v1269, %v1263
    %v1606 = vpack.c.b16 %v1270, %v1264
    %v1607 = vpack.c.b16 %v1271, %v1265
    %v1608 = vpack.c.b16 %v1272, %v1266
    %v1609 = vpack.c.b16 %v1273, %v1267
    %v1610 = vpack.c.b16 %v1274, %v1268
    %v1611 = vpack.c.b16 %v1281, %v1275
    %v1612 = vpack.c.b16 %v1282, %v1276
    %v1613 = vpack.c.b16 %v1283, %v1277
    %v1614 = vpack.c.b16 %v1284, %v1278
    %v1615 = vpack.c.b16 %v1285, %v1279
    %v1616 = vpack.c.b16 %v1286, %v1280
    %v1617 = vpack.c.b16 %v1293, %v1287
    %v1618 = vpack.c.b16 %v1294, %v1288
    %v1619 = vpack.c.b16 %v1295, %v1289
    %v1620 = vpack.c.b16 %v1296, %v1290
    %v1621 = vpack.c.b16 %v1297, %v1291
    %v1622 = vpack.c.b16 %v1298, %v1292
    %v1623 = vpack.c.b16 %v1305, %v1299
    %v1624 = vpack.c.b16 %v1306, %v1300
    %v1625 = vpack.c.b16 %v1307, %v1301
    %v1626 = vpack.c.b16 %v1308, %v1302
    %v1627 = vpack.c.b16 %v1309, %v1303
    %v1628 = vpack.c.b16 %v1310, %v1304
    %v1629 = vpack.c.b16 %v1317, %v1311
    %v1630 = vpack.c.b16 %v1318, %v1312
    %v1631 = vpack.c.b16 %v1319, %v1313
    %v1632 = vpack.c.b16 %v1320, %v1314
    %v1633 = vpack.c.b16 %v1321, %v1315
    %v1634 = vpack.c.b16 %v1322, %v1316
    %v1635 = vpack.c.b16 %v1329, %v1323
    %v1636 = vpack.c.b16 %v1330, %v1324
    %v1637 = vpack.c.b16 %v1331, %v1325
    %v1638 = vpack.c.b16 %v1332, %v1326
    %v1639 = vpack.c.b16 %v1333, %v1327
    %v1640 = vpack.c.b16 %v1334, %v1328
    %v1641 = vpack.c.b16 %v1341, %v1335
    %v1642 = vpack.c.b16 %v1342, %v1336
    %v1643 = vpack.c.b16 %v1343, %v1337
    %v1644 = vpack.c.b16 %v1344, %v1338
    %v1645 = vpack.c.b16 %v1345, %v1339
    %v1646 = vpack.c.b16 %v1346, %v1340
    %v1647 = vpack.c.b16 %v1353, %v1347
    %v1648 = vpack.c.b16 %v1354, %v1348
    %v1649 = vpack.c.b16 %v1355, %v1349
    %v1650 = vpack.c.b16 %v1356, %v1350
    %v1651 = vpack.c.b16 %v1357, %v1351
    %v1652 = vpack.c.b16 %v1358, %v1352
    %v1653 = vpack.c.b16 %v1365, %v1359
    %v1654 = vpack.c.b16 %v1366, %v1360
    %v1655 = vpack.c.b16 %v1367, %v1361
    %v1656 = vpack.c.b16 %v1368, %v1362
    %v1657 = vpack.c.b16 %v1369, %v1363
    %v1658 = vpack.c.b16 %v1370, %v1364
    %v1659 = vpack.c.b16 %v1377, %v1371
    %v1660 = vpack.c.b16 %v1378, %v1372
    %v1661 = vpack.c.b16 %v1379, %v1373
    %v1662 = vpack.c.b16 %v1380, %v1374
    %v1663 = vpack.c.b16 %v1381, %v1375
    %v1664 = vpack.c.b16 %v1382, %v1376
    %v1665 = vpack.c.b16 %v1389, %v1383
    %v1666 = vpack.c.b16 %v1390, %v1384
    %v1667 = vpack.c.b16 %v1391, %v1385
    %v1668 = vpack.c.b16 %v1392, %v1386
    %v1669 = vpack.c.b16 %v1393, %v1387
    %v1670 = vpack.c.b16 %v1394, %v1388
    %v1671 = vpack.c.b16 %v1401, %v1395
    %v1672 = vpack.c.b16 %v1402, %v1396
    %v1673 = vpack.c.b16 %v1403, %v1397
    %v1674 = vpack.c.b16 %v1404, %v1398
    %v1675 = vpack.c.b16 %v1405, %v1399
    %v1676 = vpack.c.b16 %v1406, %v1400
    %v1677 = vpack.c.b16 %v1413, %v1407
    %v1678 = vpack.c.b16 %v1414, %v1408
    %v1679 = vpack.c.b16 %v1415, %v1409
    %v1680 = vpack.c.b16 %v1416, %v1410
    %v1681 = vpack.c.b16 %v1417, %v1411
    %v1682 = vpack.c.b16 %v1418, %v1412
    %v1683 = vpack.c.b16 %v1425, %v1419
    %v1684 = vpack.c.b16 %v1426, %v1420
    %v1685 = vpack.c.b16 %v1427, %v1421
    %v1686 = vpack.c.b16 %v1428, %v1422
    %v1687 = vpack.c.b16 %v1429, %v1423
    %v1688 = vpack.c.b16 %v1430, %v1424
    %v1689 = vpack.c.b16 %v1437, %v1431
    %v1690 = vpack.c.b16 %v1438, %v1432
    %v1691 = vpack.c.b16 %v1439, %v1433
    %v1692 = vpack.c.b16 %v1440, %v1434
    %v1693 = vpack.c.b16 %v1441, %v1435
    %v1694 = vpack.c.b16 %v1442, %v1436
    %v1695 = vpack.c.b16 %v1449, %v1443
    %v1696 = vpack.c.b16 %v1450, %v1444
    %v1697 = vpack.c.b16 %v1451, %v1445
    %v1698 = vpack.c.b16 %v1452, %v1446
    %v1699 = vpack.c.b16 %v1453, %v1447
    %v1700 = vpack.c.b16 %v1454, %v1448
    %v1701 = vpack.c.b16 %v1461, %v1455
    %v1702 = vpack.c.b16 %v1462, %v1456
    %v1703 = vpack.c.b16 %v1463, %v1457
    %v1704 = vpack.c.b16 %v1464, %v1458
    %v1705 = vpack.c.b16 %v1465, %v1459
    %v1706 = vpack.c.b16 %v1466, %v1460
    %v1707 = vpack.c.b16 %v1473, %v1467
    %v1708 = vpack.c.b16 %v1474, %v1468
    %v1709 = vpack.c.b16 %v1475, %v1469
    %v1710 = vpack.c.b16 %v1476, %v1470
    %v1711 = vpack.c.b16 %v1477, %v1471
    %v1712 = vpack.c.b16 %v1478, %v1472
    %v1713 = vpack.c.b16 %v1485, %v1479
    %v1714 = vpack.c.b16 %v1486, %v1480
    %v1715 = vpack.c.b16 %v1487, %v1481
    %v1716 = vpack.c.b16 %v1488, %v1482
    %v1717 = vpack.c.b16 %v1489, %v1483
    %v1718 = vpack.c.b16 %v1490, %v1484
    %v1719 = vpack.c.b16 %v1497, %v1491
    %v1720 = vpack.c.b16 %v1498, %v1492
    %v1721 = vpack.c.b16 %v1499, %v1493
    %v1722 = vpack.c.b16 %v1500, %v1494
    %v1723 = vpack.c.b16 %v1501, %v1495
    %v1724 = vpack.c.b16 %v1502, %v1496
    %v1725 = vpack.c.b16 %v1509, %v1503
    %v1726 = vpack.c.b16 %v1510, %v1504
    %v1727 = vpack.c.b16 %v1511, %v1505
    %v1728 = vpack.c.b16 %v1512, %v1506
    %v1729 = vpack.c.b16 %v1513, %v1507
    %v1730 = vpack.c.b16 %v1514, %v1508
    %v1731 = vpack.c.b16 %v1521, %v1515
    %v1732 = vpack.c.b16 %v1522, %v1516
    %v1733 = vpack.c.b16 %v1523, %v1517
    %v1734 = vpack.c.b16 %v1524, %v1518
    %v1735 = vpack.c.b16 %v1525, %v1519
    %v1736 = vpack.c.b16 %v1526, %v1520
    %v1737 = vpack.c.b16 %v1533, %v1527
    %v1738 = vpack.c.b16 %v1534, %v1528
    %v1739 = vpack.c.b16 %v1535, %v1529
    %v1740 = vpack.c.b16 %v1536, %v1530
    %v1741 = vpack.c.b16 %v1537, %v1531
    %v1742 = vpack.c.b16 %v1538, %v1532
    %v1743 = vpack.c.b16 %v1545, %v1539
    %v1744 = vpack.c.b16 %v1546, %v1540
    %v1745 = vpack.c.b16 %v1547, %v1541
    %v1746 = vpack.c.b16 %v1548, %v1542
    %v1747 = vpack.c.b16 %v1549, %v1543
    %v1748 = vpack.c.b16 %v1550, %v1544
    %v1749 = vpack.c.b16 %v1557, %v1551
    %v1750 = vpack.c.b16 %v1558, %v1552
    %v1751 = vpack.c.b16 %v1559, %v1553
    %v1752 = vpack.c.b16 %v1560, %v1554
    %v1753 = vpack.c.b16 %v1561, %v1555
    %v1754 = vpack.c.b16 %v1562, %v1556
    %1947 = vmatprep.subr.bf16.mxu0 %v1564
    %1948 = vmatpush1.bf16.msra.mxu0 %v1563
    %1949 = vmatprep.subr.bf16.mxu0 %v1570
    %1950 = vmatpush1.bf16.msra.mxu0 %v1569
    %1951 = vmatprep.subr.bf16.mxu0 %v1576
    %1952 = vmatpush1.bf16.msra.mxu0 %v1575
    %1953 = vmatprep.subr.bf16.mxu0 %v1582
    %1954 = vmatpush1.bf16.msra.mxu0 %v1581
    %1955 = vmatprep.subr.bf16.mxu0 %v1588
    %1956 = vmatpush1.bf16.msra.mxu0 %v1587
    %1957 = vmatprep.subr.bf16.mxu0 %v1594
    %1958 = vmatpush1.bf16.msra.mxu0 %v1593
    %1959 = vmatprep.subr.bf16.mxu0 %v1600
    %1960 = vmatpush1.bf16.msra.mxu0 %v1599
    %1961 = vmatprep.subr.bf16.mxu0 %v1606
    %1962 = vmatpush1.bf16.msra.mxu0 %v1605
    %1963 = vmatprep.subr.bf16.mxu0 %v1612
    %1964 = vmatpush1.bf16.msra.mxu0 %v1611
    %1965 = vmatprep.subr.bf16.mxu0 %v1618
    %1966 = vmatpush1.bf16.msra.mxu0 %v1617
    %1967 = vmatprep.subr.bf16.mxu0 %v1624
    %1968 = vmatpush1.bf16.msra.mxu0 %v1623
    %1969 = vmatprep.subr.bf16.mxu0 %v1630
    %1970 = vmatpush1.bf16.msra.mxu0 %v1629
    %1971 = vmatprep.subr.bf16.mxu0 %v1636
    %1972 = vmatpush1.bf16.msra.mxu0 %v1635
    %1973 = vmatprep.subr.bf16.mxu0 %v1642
    %1974 = vmatpush1.bf16.msra.mxu0 %v1641
    %1975 = vmatprep.subr.bf16.mxu0 %v1648
    %1976 = vmatpush1.bf16.msra.mxu0 %v1647
    %1977 = vmatprep.subr.bf16.mxu0 %v1654
    %1978 = vmatpush1.bf16.msra.mxu0 %v1653
    %1979 = vmatprep.mubr.bf16.mxu0 %v760
    %1980 = vmatmul.mubr.bf16.gmra.mrb[0].mxu0 %v759
    %v1981 = vpop.f32.mrb[0].mxu0
    %v1982 = vadd.f32 %v960, %v1981
    %v1983 = vpop.f32.mrb[0].mxu0
    %v1984 = vadd.f32 %v964, %v1983
    %v1985 = vpop.f32.mrb[0].mxu0
    %v1986 = vadd.f32 %v960, %v1985
    %v1987 = vpop.f32.mrb[0].mxu0
    %v1988 = vadd.f32 %v964, %v1987
    %1989 = vdwg.mxu0
    %1990 = vmatprep.subr.bf16.mxu0 %v1660
    %1991 = vmatpush1.bf16.msra.mxu0 %v1659
    %1992 = vmatprep.subr.bf16.mxu0 %v1666
    %1993 = vmatpush1.bf16.msra.mxu0 %v1665
    %1994 = vmatprep.subr.bf16.mxu0 %v1672
    %1995 = vmatpush1.bf16.msra.mxu0 %v1671
    %1996 = vmatprep.subr.bf16.mxu0 %v1678
    %1997 = vmatpush1.bf16.msra.mxu0 %v1677
    %1998 = vmatprep.subr.bf16.mxu0 %v1684
    %1999 = vmatpush1.bf16.msra.mxu0 %v1683
    %2000 = vmatprep.subr.bf16.mxu0 %v1690
    %2001 = vmatpush1.bf16.msra.mxu0 %v1689
    %2002 = vmatprep.subr.bf16.mxu0 %v1696
    %2003 = vmatpush1.bf16.msra.mxu0 %v1695
    %2004 = vmatprep.subr.bf16.mxu0 %v1702
    %2005 = vmatpush1.bf16.msra.mxu0 %v1701
    %2006 = vmatprep.subr.bf16.mxu0 %v1708
    %2007 = vmatpush1.bf16.msra.mxu0 %v1707
    %2008 = vmatprep.subr.bf16.mxu0 %v1714
    %2009 = vmatpush1.bf16.msra.mxu0 %v1713
    %2010 = vmatprep.subr.bf16.mxu0 %v1720
    %2011 = vmatpush1.bf16.msra.mxu0 %v1719
    %2012 = vmatprep.subr.bf16.mxu0 %v1726
    %2013 = vmatpush1.bf16.msra.mxu0 %v1725
    %2014 = vmatprep.subr.bf16.mxu0 %v1732
    %2015 = vmatpush1.bf16.msra.mxu0 %v1731
    %2016 = vmatprep.subr.bf16.mxu0 %v1738
    %2017 = vmatpush1.bf16.msra.mxu0 %v1737
    %2018 = vmatprep.subr.bf16.mxu0 %v1744
    %2019 = vmatpush1.bf16.msra.mxu0 %v1743
    %2020 = vmatprep.subr.bf16.mxu0 %v1750
    %2021 = vmatpush1.bf16.msra.mxu0 %v1749
    %2022 = vmatprep.mubr.bf16.mxu0 %v762
    %2023 = vmatmul.mubr.bf16.gmra.mrb[0].mxu0 %v761
    %v2024 = vpop.f32.mrb[0].mxu0
    %v2025 = vadd.f32 %v1982, %v2024
    %v2026 = vpop.f32.mrb[0].mxu0
    %v2027 = vadd.f32 %v1984, %v2026
    %v2028 = vpop.f32.mrb[0].mxu0
    %v2029 = vadd.f32 %v1986, %v2028
    %v2030 = vpop.f32.mrb[0].mxu0
    %v2031 = vadd.f32 %v1988, %v2030
    %2032 = vdwg.mxu0
    %2033 = vmatprep.subr.bf16.mxu0 %v1566
    %2034 = vmatpush1.bf16.msra.mxu0 %v1565
    %2035 = vmatprep.subr.bf16.mxu0 %v1572
    %2036 = vmatpush1.bf16.msra.mxu0 %v1571
    %2037 = vmatprep.subr.bf16.mxu0 %v1578
    %2038 = vmatpush1.bf16.msra.mxu0 %v1577
    %2039 = vmatprep.subr.bf16.mxu0 %v1584
    %2040 = vmatpush1.bf16.msra.mxu0 %v1583
    %2041 = vmatprep.subr.bf16.mxu0 %v1590
    %2042 = vmatpush1.bf16.msra.mxu0 %v1589
    %2043 = vmatprep.subr.bf16.mxu0 %v1596
    %2044 = vmatpush1.bf16.msra.mxu0 %v1595
    %2045 = vmatprep.subr.bf16.mxu0 %v1602
    %2046 = vmatpush1.bf16.msra.mxu0 %v1601
    %2047 = vmatprep.subr.bf16.mxu0 %v1608
    %2048 = vmatpush1.bf16.msra.mxu0 %v1607
    %2049 = vmatprep.subr.bf16.mxu0 %v1614
    %2050 = vmatpush1.bf16.msra.mxu0 %v1613
    %2051 = vmatprep.subr.bf16.mxu0 %v1620
    %2052 = vmatpush1.bf16.msra.mxu0 %v1619
    %2053 = vmatprep.subr.bf16.mxu0 %v1626
    %2054 = vmatpush1.bf16.msra.mxu0 %v1625
    %2055 = vmatprep.subr.bf16.mxu0 %v1632
    %2056 = vmatpush1.bf16.msra.mxu0 %v1631
    %2057 = vmatprep.subr.bf16.mxu0 %v1638
    %2058 = vmatpush1.bf16.msra.mxu0 %v1637
    %2059 = vmatprep.subr.bf16.mxu0 %v1644
    %2060 = vmatpush1.bf16.msra.mxu0 %v1643
    %2061 = vmatprep.subr.bf16.mxu0 %v1650
    %2062 = vmatpush1.bf16.msra.mxu0 %v1649
    %2063 = vmatprep.subr.bf16.mxu0 %v1656
    %2064 = vmatpush1.bf16.msra.mxu0 %v1655
    %2065 = vmatprep.mubr.bf16.mxu0 %v760
    %2066 = vmatmul.mubr.bf16.gmra.mrb[0].mxu0 %v759
    %v2067 = vpop.f32.mrb[0].mxu0
    %v2068 = vadd.f32 %v968, %v2067
    %v2069 = vpop.f32.mrb[0].mxu0
    %v2070 = vadd.f32 %v972, %v2069
    %v2071 = vpop.f32.mrb[0].mxu0
    %v2072 = vadd.f32 %v968, %v2071
    %v2073 = vpop.f32.mrb[0].mxu0
    %v2074 = vadd.f32 %v972, %v2073
    %2075 = vdwg.mxu0
    %2076 = vmatprep.subr.bf16.mxu0 %v1662
    %2077 = vmatpush1.bf16.msra.mxu0 %v1661
    %2078 = vmatprep.subr.bf16.mxu0 %v1668
    %2079 = vmatpush1.bf16.msra.mxu0 %v1667
    %2080 = vmatprep.subr.bf16.mxu0 %v1674
    %2081 = vmatpush1.bf16.msra.mxu0 %v1673
    %2082 = vmatprep.subr.bf16.mxu0 %v1680
    %2083 = vmatpush1.bf16.msra.mxu0 %v1679
    %2084 = vmatprep.subr.bf16.mxu0 %v1686
    %2085 = vmatpush1.bf16.msra.mxu0 %v1685
    %2086 = vmatprep.subr.bf16.mxu0 %v1692
    %2087 = vmatpush1.bf16.msra.mxu0 %v1691
    %2088 = vmatprep.subr.bf16.mxu0 %v1698
    %2089 = vmatpush1.bf16.msra.mxu0 %v1697
    %2090 = vmatprep.subr.bf16.mxu0 %v1704
    %2091 = vmatpush1.bf16.msra.mxu0 %v1703
    %2092 = vmatprep.subr.bf16.mxu0 %v1710
    %2093 = vmatpush1.bf16.msra.mxu0 %v1709
    %2094 = vmatprep.subr.bf16.mxu0 %v1716
    %2095 = vmatpush1.bf16.msra.mxu0 %v1715
    %2096 = vmatprep.subr.bf16.mxu0 %v1722
    %2097 = vmatpush1.bf16.msra.mxu0 %v1721
    %2098 = vmatprep.subr.bf16.mxu0 %v1728
    %2099 = vmatpush1.bf16.msra.mxu0 %v1727
    %2100 = vmatprep.subr.bf16.mxu0 %v1734
    %2101 = vmatpush1.bf16.msra.mxu0 %v1733
    %2102 = vmatprep.subr.bf16.mxu0 %v1740
    %2103 = vmatpush1.bf16.msra.mxu0 %v1739
    %2104 = vmatprep.subr.bf16.mxu0 %v1746
    %2105 = vmatpush1.bf16.msra.mxu0 %v1745
    %2106 = vmatprep.subr.bf16.mxu0 %v1752
    %2107 = vmatpush1.bf16.msra.mxu0 %v1751
    %2108 = vmatprep.mubr.bf16.mxu0 %v762
    %2109 = vmatmul.mubr.bf16.gmra.mrb[0].mxu0 %v761
    %v2110 = vpop.f32.mrb[0].mxu0
    %v2111 = vadd.f32 %v2068, %v2110
    %v2112 = vpop.f32.mrb[0].mxu0
    %v2113 = vadd.f32 %v2070, %v2112
    %v2114 = vpop.f32.mrb[0].mxu0
    %v2115 = vadd.f32 %v2072, %v2114
    %v2116 = vpop.f32.mrb[0].mxu0
    %v2117 = vadd.f32 %v2074, %v2116
    %2118 = vdwg.mxu0
    %2119 = vmatprep.subr.bf16.mxu0 %v1568
    %2120 = vmatpush1.bf16.msra.mxu0 %v1567
    %2121 = vmatprep.subr.bf16.mxu0 %v1574
    %2122 = vmatpush1.bf16.msra.mxu0 %v1573
    %2123 = vmatprep.subr.bf16.mxu0 %v1580
    %2124 = vmatpush1.bf16.msra.mxu0 %v1579
    %2125 = vmatprep.subr.bf16.mxu0 %v1586
    %2126 = vmatpush1.bf16.msra.mxu0 %v1585
    %2127 = vmatprep.subr.bf16.mxu0 %v1592
    %2128 = vmatpush1.bf16.msra.mxu0 %v1591
    %2129 = vmatprep.subr.bf16.mxu0 %v1598
    %2130 = vmatpush1.bf16.msra.mxu0 %v1597
    %2131 = vmatprep.subr.bf16.mxu0 %v1604
    %2132 = vmatpush1.bf16.msra.mxu0 %v1603
    %2133 = vmatprep.subr.bf16.mxu0 %v1610
    %2134 = vmatpush1.bf16.msra.mxu0 %v1609
    %2135 = vmatprep.subr.bf16.mxu0 %v1616
    %2136 = vmatpush1.bf16.msra.mxu0 %v1615
    %2137 = vmatprep.subr.bf16.mxu0 %v1622
    %2138 = vmatpush1.bf16.msra.mxu0 %v1621
    %2139 = vmatprep.subr.bf16.mxu0 %v1628
    %2140 = vmatpush1.bf16.msra.mxu0 %v1627
    %2141 = vmatprep.subr.bf16.mxu0 %v1634
    %2142 = vmatpush1.bf16.msra.mxu0 %v1633
    %2143 = vmatprep.subr.bf16.mxu0 %v1640
    %2144 = vmatpush1.bf16.msra.mxu0 %v1639
    %2145 = vmatprep.subr.bf16.mxu0 %v1646
    %2146 = vmatpush1.bf16.msra.mxu0 %v1645
    %2147 = vmatprep.subr.bf16.mxu0 %v1652
    %2148 = vmatpush1.bf16.msra.mxu0 %v1651
    %2149 = vmatprep.subr.bf16.mxu0 %v1658
    %2150 = vmatpush1.bf16.msra.mxu0 %v1657
    %2151 = vmatprep.mubr.bf16.mxu0 %v760
    %2152 = vmatmul.mubr.bf16.gmra.mrb[0].mxu0 %v759
    %v2153 = vpop.f32.mrb[0].mxu0
    %v2154 = vadd.f32 %v976, %v2153
    %v2155 = vpop.f32.mrb[0].mxu0
    %v2156 = vadd.f32 %v980, %v2155
    %v2157 = vpop.f32.mrb[0].mxu0
    %v2158 = vadd.f32 %v976, %v2157
    %v2159 = vpop.f32.mrb[0].mxu0
    %v2160 = vadd.f32 %v980, %v2159
    %2161 = vdwg.mxu0
    %2162 = vmatprep.subr.bf16.mxu0 %v1664
    %2163 = vmatpush1.bf16.msra.mxu0 %v1663
    %2164 = vmatprep.subr.bf16.mxu0 %v1670
    %2165 = vmatpush1.bf16.msra.mxu0 %v1669
    %2166 = vmatprep.subr.bf16.mxu0 %v1676
    %2167 = vmatpush1.bf16.msra.mxu0 %v1675
    %2168 = vmatprep.subr.bf16.mxu0 %v1682
    %2169 = vmatpush1.bf16.msra.mxu0 %v1681
    %2170 = vmatprep.subr.bf16.mxu0 %v1688
    %2171 = vmatpush1.bf16.msra.mxu0 %v1687
    %2172 = vmatprep.subr.bf16.mxu0 %v1694
    %2173 = vmatpush1.bf16.msra.mxu0 %v1693
    %2174 = vmatprep.subr.bf16.mxu0 %v1700
    %2175 = vmatpush1.bf16.msra.mxu0 %v1699
    %2176 = vmatprep.subr.bf16.mxu0 %v1706
    %2177 = vmatpush1.bf16.msra.mxu0 %v1705
    %2178 = vmatprep.subr.bf16.mxu0 %v1712
    %2179 = vmatpush1.bf16.msra.mxu0 %v1711
    %2180 = vmatprep.subr.bf16.mxu0 %v1718
    %2181 = vmatpush1.bf16.msra.mxu0 %v1717
    %2182 = vmatprep.subr.bf16.mxu0 %v1724
    %2183 = vmatpush1.bf16.msra.mxu0 %v1723
    %2184 = vmatprep.subr.bf16.mxu0 %v1730
    %2185 = vmatpush1.bf16.msra.mxu0 %v1729
    %2186 = vmatprep.subr.bf16.mxu0 %v1736
    %2187 = vmatpush1.bf16.msra.mxu0 %v1735
    %2188 = vmatprep.subr.bf16.mxu0 %v1742
    %2189 = vmatpush1.bf16.msra.mxu0 %v1741
    %2190 = vmatprep.subr.bf16.mxu0 %v1748
    %2191 = vmatpush1.bf16.msra.mxu0 %v1747
    %2192 = vmatprep.subr.bf16.mxu0 %v1754
    %2193 = vmatpush1.bf16.msra.mxu0 %v1753
    %2194 = vmatprep.mubr.bf16.mxu0 %v762
    %2195 = vmatmul.mubr.bf16.gmra.mrb[0].mxu0 %v761
    %v2196 = vpop.f32.mrb[0].mxu0
    %v2197 = vadd.f32 %v2154, %v2196
    %v2198 = vpop.f32.mrb[0].mxu0
    %v2199 = vadd.f32 %v2156, %v2198
    %v2200 = vpop.f32.mrb[0].mxu0
    %v2201 = vadd.f32 %v2158, %v2200
    %v2202 = vpop.f32.mrb[0].mxu0
    %v2203 = vadd.f32 %v2160, %v2202
    %2204 = vdwg.mxu0
    %2205 = vst [vmem:[#allocation11] sm:$0xff] %v2025
    %2206 = vst [vmem:[#allocation11 + $0x8] sm:$0xff] %v2027
    %2207 = vst [vmem:[#allocation11 + $0x10] sm:$0xff] %v2111
    %2208 = vst [vmem:[#allocation11 + $0x18] sm:$0xff] %v2113
    %2209 = vst [vmem:[#allocation11 + $0x20] sm:$0xff] %v2197
    %2210 = vst [vmem:[#allocation11 + $0x28] sm:$0xff] %v2199
    %2211 = vst [vmem:[#allocation11 + $0x30] sm:$0xff] %v2029
    %2212 = vst [vmem:[#allocation11 + $0x38] sm:$0xff] %v2031
    %2213 = vst [vmem:[#allocation11 + $0x40] sm:$0xff] %v2115
    %2214 = vst [vmem:[#allocation11 + $0x48] sm:$0xff] %v2117
    %2215 = vst [vmem:[#allocation11 + $0x50] sm:$0xff] %v2201
    %2216 = vst [vmem:[#allocation11 + $0x58] sm:$0xff] %v2203
    // Predicated region
    $region50: #{tpu_custom_call.1} parent=1 // pred_check
      _
    $region51: #{tpu_custom_call.1} parent=1 // pred_check_branch
      %2218 = sbr.rel (0) target = $region53
    $region52: #{tpu_custom_call.1} parent=1 // pred_region
      %s2220 = ssub.s32 1536, 1536
      %2221 = vsyncadd [#allocation4], %s2220
      %s2222 = sshll.u32 [#allocation11], 4
      %s2223 = int_to_ptr.vmem [resolvable:$true] %s2222
      %2228 = dma.vmem_to_hbm [thread:$0]  %s2223, 1536, %s7, [#allocation4], 768, 768, 48
    $region53: #{tpu_custom_call.1} parent=1 // pred_fallthru
      _
    // Predicated region
    $region54: #{tpu_custom_call.1} parent=1 // pred_check
      _
    $region55: #{tpu_custom_call.1} parent=1 // pred_check_branch
      %2230 = sbr.rel (0) target = $region57
    $region56: #{tpu_custom_call.1} parent=1 // pred_region
      %2231 = dma.done [#allocation4], 1536
    $region57: #{tpu_custom_call.1} parent=1 // pred_fallthru
      _
    %2232 = vsyncpa [#allocation3], 1
    %2233 = vsyncpa [#allocation6], 1
    %2234 = vsyncpa [#allocation9], 1
    %2235 = vsyncpa [#allocation4], 1

</llo_original>
